<compile_context>
chip_gen: v5e
topology: v5e:2x2
jax: 0.10.0
libtpu: 0.0.40
codegen_flags: <defaults>
</compile_context>

<pallas_src>
import functools

import numpy as np
import jax
import jax.numpy as jnp
from jax import lax
from jax.experimental import pallas as pl
from jax.experimental.pallas import tpu as pltpu


_VMEM_LIMIT = 32 * 1024 * 1024  # explicit, portable headroom on v5e/v6e/v7x


# --------------------------------------------------------------------------- blur

def _gaussian_taps(scale):
    """FOMM AntiAliasInterpolation2d 1-D taps (normalized) + kernel size / pad."""
    sigma = (1.0 / scale - 1.0) / 2.0
    ksz = 2 * int(round(sigma * 4)) + 1
    ka = ksz // 2
    coords = np.arange(ksz, dtype=np.float64)
    g = np.exp(-((coords - (ksz - 1) / 2.0) ** 2) / (2.0 * sigma ** 2))
    g = g / g.sum()
    return tuple(float(v) for v in g), ksz, ka


def _blur_ds_kernel(xp_ref, o_ref, *, taps, C, W, Ho, inv):
    """Separable depthwise Gaussian + fused nearest ROW subsample (VPU only).

    xp_ref: (Hp, Wp*C) f32 zero-padded image rows (one batch element)
    o_ref : (Ho, W*C)  f32 blurred rows 0, inv, 2*inv, ...  (columns still full)
    """
    WC = W * C
    # vertical pass, only on the rows that survive the nearest subsample
    v = taps[0] * xp_ref[pl.ds(0, Ho, stride=inv), :]
    for t in range(1, len(taps)):
        v = v + taps[t] * xp_ref[pl.ds(t, Ho, stride=inv), :]
    # horizontal pass: lane offsets t*C (all taps, every column; see column TODO)
    o = taps[0] * v[:, 0:WC]
    for t in range(1, len(taps)):
        o = o + taps[t] * v[:, t * C:t * C + WC]
    o_ref[...] = o


def _antialias_blur_ds_ref(x, taps, ka, inv):
    """Pure-JAX mirror of the Pallas blur+row-subsample (same tap/order)."""
    B, H, W, C = x.shape
    Hp, Wp = H + 2 * ka, W + 2 * ka
    Ho = H // inv
    WC = W * C
    xp = jnp.pad(x, ((0, 0), (ka, ka), (ka, ka), (0, 0))).reshape(B, Hp, Wp * C)
    v = taps[0] * xp[:, 0:inv * (Ho - 1) + 1:inv, :]
    for t in range(1, len(taps)):
        v = v + taps[t] * xp[:, t:t + inv * (Ho - 1) + 1:inv, :]
    o = taps[0] * v[:, :, 0:WC]
    for t in range(1, len(taps)):
        o = o + taps[t] * v[:, :, t * C:t * C + WC]
    return o.reshape(B, Ho, W, C)[:, :, ::inv, :]


def _antialias_downsample(x, scale, use_pallas=True):
    """FOMM AntiAliasInterpolation2d: identity at scale 1, else blur + nearest."""
    if scale == 1:
        return x
    taps, ksz, ka = _gaussian_taps(scale)
    inv = int(round(1.0 / scale))
    B, H, W, C = x.shape
    Ho = H // inv                                # assumes H, W divisible by inv
    if not use_pallas:
        return _antialias_blur_ds_ref(x, taps, ka, inv)

    Hp, Wp = H + 2 * ka, W + 2 * ka
    xp = jnp.pad(x, ((0, 0), (ka, ka), (ka, ka), (0, 0))).reshape(B, Hp, Wp * C)
    kern = functools.partial(_blur_ds_kernel, taps=taps, C=C, W=W, Ho=Ho, inv=inv)
    out = pl.pallas_call(
        kern,
        out_shape=jax.ShapeDtypeStruct((B, Ho, W * C), jnp.float32),
        grid=(B,),
        in_specs=[pl.BlockSpec((None, Hp, Wp * C), lambda b: (b, 0, 0))],
        out_specs=pl.BlockSpec((None, Ho, W * C), lambda b: (b, 0, 0)),
        compiler_params=pltpu.CompilerParams(
            dimension_semantics=("parallel",),
            vmem_limit_bytes=_VMEM_LIMIT),
        cost_estimate=pl.CostEstimate(
            flops=2 * B * Ho * (Wp * C + W * C) * ksz,
            transcendentals=0,
            bytes_accessed=4 * (B * Hp * Wp * C + B * Ho * W * C)),
    )(xp)
    # column (nearest) subsample is a cheap wrapper-side strided slice (see TODO)
    return out.reshape(B, Ho, W, C)[:, :, ::inv, :]


# ---------------------------------------------------------- discriminator GAN loss

def _disc_loss_kernel(img_ref, mask_ref, w1_ref, b1_ref, w2_ref, b2_ref, o_ref,
                      *, Wp, Nout, n_real):
    """One padded image per grid step; in-kernel 3x3 patch contraction.

    img_ref : (Hp*Wp, cin) bf16  flattened zero-padded temporal-concat image
    mask_ref: (Nout, 1)    f32   1.0 where the flat row is a real output pixel
    w1_ref  : (9, cin, CH) bf16  3x3 conv taps (dy*3+dx major)
    b1/w2   : (1, CH) f32, b2: (1, 1) f32
    o_ref   : (1, 128) f32       per-image partial loss sum in lane 0
    """
    x = img_ref[...].astype(jnp.float32)                      # exact upcast
    h = None
    for dy in range(3):
        for dx in range(3):
            a = dy * Wp + dx
            slab = x[a:a + Nout, :].astype(jnp.bfloat16)      # (Nout, cin)
            c = jnp.dot(slab, w1_ref[dy * 3 + dx],
                        preferred_element_type=jnp.float32)   # (Nout, CH)
            h = c if h is None else h + c
    h = h + b1_ref[...]
    h = jnp.where(h > 0, h, 0.2 * h)                          # LeakyReLU(0.2), f32
    # 1x1 conv (N=1) as VPU multiply + lane reduce (no 1-wide MXU matmul)
    d = jnp.sum(h * w2_ref[...], axis=-1, keepdims=True) + b2_ref[...]    # (Nout, 1)

    # first n_real grid steps are real images (target 1), the rest generated (0)
    target = (pl.program_id(0) < n_real).astype(jnp.float32)
    partial = jnp.sum(mask_ref[...] * (target - d) ** 2)

    lane = lax.broadcasted_iota(jnp.int32, (1, 128), 1)
    o_ref[...] = jnp.where(lane == 0, partial, 0.0)


def _disc_gan_loss_pallas(imgs, w1_9, b1, w2_row, b2, n_real):
    """imgs: (2B, H, W, cin) f32, real batch first.  Returns sum((1-D_r)^2 + D_g^2)."""
    N2, H, W, cin = imgs.shape
    CH = w1_9.shape[-1]
    Hp, Wp = H + 2, W + 2
    Ntot = Hp * Wp
    Nout = (H - 1) * Wp + W                      # flat output rows (incl. pad cols)
    # single small pass: pad + flatten + bf16 cast (no im2col, no concat)
    xflat = jnp.pad(imgs, ((0, 0), (1, 1), (1, 1), (0, 0))) \
               .reshape(N2, Ntot, cin).astype(jnp.bfloat16)
    col = np.arange(Nout) % Wp
    mask = jnp.asarray((col < W).astype(np.float32).reshape(Nout, 1))
    w1_bf = w1_9.astype(jnp.bfloat16)

    kern = functools.partial(_disc_loss_kernel, Wp=Wp, Nout=Nout, n_real=n_real)
    partials = pl.pallas_call(
        kern,
        out_shape=jax.ShapeDtypeStruct((1, 128 * N2), jnp.float32),
        grid=(N2,),
        in_specs=[
            pl.BlockSpec((None, Ntot, cin), lambda i: (i, 0, 0)),
            pl.BlockSpec((Nout, 1), lambda i: (0, 0)),
            pl.BlockSpec((9, cin, CH), lambda i: (0, 0, 0)),
            pl.BlockSpec((1, CH), lambda i: (0, 0)),
            pl.BlockSpec((1, CH), lambda i: (0, 0)),
            pl.BlockSpec((1, 1), lambda i: (0, 0)),
        ],
        out_specs=pl.BlockSpec((1, 128), lambda i: (0, i)),
        compiler_params=pltpu.CompilerParams(
            dimension_semantics=("parallel",),
            vmem_limit_bytes=_VMEM_LIMIT),
        cost_estimate=pl.CostEstimate(
            flops=N2 * (2 * 9 * Nout * cin * CH + 6 * Nout * CH),
            transcendentals=0,
            bytes_accessed=2 * N2 * Ntot * cin + 4 * Nout + 2 * 9 * cin * CH
                           + 4 * (2 * CH + 1) + 4 * 128 * N2),
    )(xflat, mask, w1_bf, b1, w2_row, b2)
    return jnp.sum(partials)


def _disc_gan_loss_ref(imgs, w1_9, b1, w2_row, b2, n_real):
    """Pure-JAX mirror (same bf16 quantization / f32 accumulation / same order)."""
    N2, H, W, cin = imgs.shape
    Hp, Wp = H + 2, W + 2
    Nout = (H - 1) * Wp + W
    xflat = jnp.pad(imgs, ((0, 0), (1, 1), (1, 1), (0, 0))) \
               .reshape(N2, Hp * Wp, cin).astype(jnp.bfloat16)
    w1_bf = w1_9.astype(jnp.bfloat16)
    h = None
    for dy in range(3):
        for dx in range(3):
            a = dy * Wp + dx
            slab = xflat[:, a:a + Nout, :]
            c = jnp.dot(slab, w1_bf[dy * 3 + dx], preferred_element_type=jnp.float32)
            h = c if h is None else h + c
    h = h + b1
    h = jnp.where(h > 0, h, 0.2 * h)
    d = jnp.sum(h * w2_row, axis=-1, keepdims=True) + b2             # (N2, Nout, 1)
    col = jnp.arange(Nout) % Wp
    valid = (col < W).astype(jnp.float32).reshape(1, Nout, 1)
    target = (jnp.arange(N2) < n_real).astype(jnp.float32).reshape(N2, 1, 1)
    return jnp.sum(valid * (target - d) ** 2)


# ----------------------------------------------------------------------------- glue

def _nchw_to_nhwc(x):
    return jnp.transpose(x, (0, 2, 3, 1))


def init_params(key, *, num_channels=3, num_temporal=2, scales=(1, 0.5), hidden=32):
    cin = num_channels * num_temporal
    disc = {}
    for s in scales:
        key, k1, k2, k3, k4 = jax.random.split(key, 5)
        disc[s] = {
            'w1': 0.1 * jax.random.normal(k1, (9, cin, hidden), jnp.float32),  # dy*3+dx
            'b1': 0.01 * jax.random.normal(k2, (1, hidden), jnp.float32),
            'w2_row': 0.1 * jax.random.normal(k3, (1, hidden), jnp.float32),
            'b2': 0.01 * jax.random.normal(k4, (1, 1), jnp.float32),
        }
    return {
        'num_channels': num_channels,
        'num_temporal': num_temporal,
        'scales': tuple(scales),
        'hidden': hidden,
        'loss_weights': {'generator_gan': 1.0, 'discriminator_temporal_gan': 1.0},
        'disc': disc,
    }


def forward(x_dict, generated_dict, params, use_pallas=True):
    """Mirrors DiscriminatorFullModel_Temporal.forward."""
    scales = params['scales']
    T = params['num_temporal']
    loss_weights = params['loss_weights']

    # stack every frame (real first, then detached generated) so the pyramid blur
    # runs as ONE pallas_call per scale over all 2*T*B images.
    frames = [_nchw_to_nhwc(x_dict['driving_%d' % d]) for d in range(T)]
    frames += [_nchw_to_nhwc(lax.stop_gradient(
        generated_dict['driving_%d' % d]['prediction'])) for d in range(T)]
    stack = jnp.stack(frames, axis=0)                       # (2T, B, H, W, C)
    twoT, B, H, W, C = stack.shape
    stack = stack.reshape(twoT * B, H, W, C).astype(jnp.float32)

    loss_values = {}
    if loss_weights['generator_gan'] != 0:
        value_total = 0.0
        for s in scales:
            ys = _antialias_downsample(stack, s, use_pallas)  # (2T*B, Hs, Ws, C)
            Hs, Ws = ys.shape[1], ys.shape[2]
            # temporal channel concat (torch cat dim=1): -> (2B, Hs, Ws, T*C), real first
            y = ys.reshape(2, T, B, Hs, Ws, C).transpose(0, 2, 3, 4, 1, 5) \
                  .reshape(2 * B, Hs, Ws, T * C)
            dp = params['disc'][s]
            fn = _disc_gan_loss_pallas if use_pallas else _disc_gan_loss_ref
            loss_sum = fn(y, dp['w1'], dp['b1'], dp['w2_row'], dp['b2'], n_real=B)
            # prediction_map is (B, 1, Hs, Ws): value.mean() divides by B*Hs*Ws
            mean_val = loss_sum / float(B * Hs * Ws)
            value_total = value_total + loss_weights['discriminator_temporal_gan'] * mean_val
        loss_values['disc_temporal_gan'] = value_total
    else:
        loss_values['disc_temporal_gan'] = {}
    return loss_values


# ----------------------------------------------------------------------------- main

if __name__ == "__main__":
    key = jax.random.PRNGKey(0)
    B, C, H, W = 2, 3, 16, 16
    NUM_TEMPORAL = 2

    key, kp = jax.random.split(key)
    params = init_params(kp, num_channels=C, num_temporal=NUM_TEMPORAL,
                         scales=(1, 0.5), hidden=32)

    x_dict, generated_dict = {}, {}
    for d in range(NUM_TEMPORAL):
        key, k1, k2 = jax.random.split(key, 3)
        x_dict['driving_%d' % d] = jax.random.uniform(k1, (B, C, H, W), jnp.float32)
        generated_dict['driving_%d' % d] = {
            'prediction': jax.random.uniform(k2, (B, C, H, W), jnp.float32)
        }

    out = forward(x_dict, generated_dict, params, use_pallas=True)
    loss = jax.block_until_ready(out['disc_temporal_gan'])

    # pure-JAX reference (same math / same bf16 quantization, no Pallas)
    ref = forward(x_dict, generated_dict, params, use_pallas=False)
    ref_loss = jax.block_until_ready(ref['disc_temporal_gan'])
    assert np.allclose(np.asarray(loss), np.asarray(ref_loss), rtol=1e-3, atol=1e-4), \
        (loss, ref_loss)

    print("KERNEL_OK")
</pallas_src>

<mosaic_0001>
module attributes {stable_mosaic.version = 11 : i64} {
  func.func @_disc_loss_kernel(%arg0: i32, %arg1: memref<1x324x6xbf16, #tpu.memory_space<vmem>>, %arg2: memref<286x1xf32, #tpu.memory_space<vmem>>, %arg3: memref<9x6x32xbf16, #tpu.memory_space<vmem>>, %arg4: memref<1x32xf32, #tpu.memory_space<vmem>>, %arg5: memref<1x32xf32, #tpu.memory_space<vmem>>, %arg6: memref<1x1xf32, #tpu.memory_space<vmem>>, %arg7: memref<1x128xf32, #tpu.memory_space<vmem>>) attributes {dimension_semantics = [#tpu.dimension_semantics<parallel>], iteration_bounds = array<i64: 4>, scalar_prefetch = 0 : i64, scratch_operands = 0 : i64, tpu.core_type = #tpu.core_type<tc>, window_params = [{transform_indices = @transform_0, window_bounds = array<i64: 1, 324, 6>}, {pipeline_mode = #tpu.pipeline_mode<synchronous>, transform_indices = @transform_1, window_bounds = array<i64: 286, 1>}, {pipeline_mode = #tpu.pipeline_mode<synchronous>, transform_indices = @transform_2, window_bounds = array<i64: 9, 6, 32>}, {pipeline_mode = #tpu.pipeline_mode<synchronous>, transform_indices = @transform_3, window_bounds = array<i64: 1, 32>}, {pipeline_mode = #tpu.pipeline_mode<synchronous>, transform_indices = @transform_4, window_bounds = array<i64: 1, 32>}, {pipeline_mode = #tpu.pipeline_mode<synchronous>, transform_indices = @transform_5, window_bounds = array<i64: 1, 1>}, {transform_indices = @transform_6, window_bounds = array<i64: 1, 128>}]} {
    %c0 = arith.constant 0 : index
    %c0_0 = arith.constant 0 : index
    %c0_1 = arith.constant 0 : index
    %0 = vector.load %arg1[%c0, %c0_0, %c0_1] : memref<1x324x6xbf16, #tpu.memory_space<vmem>>, vector<1x324x6xbf16>
    %1 = vector.shape_cast %0 : vector<1x324x6xbf16> to vector<324x6xbf16>
    %2 = arith.extf %1 : vector<324x6xbf16> to vector<324x6xf32>
    %3 = vector.extract_strided_slice %2 {offsets = [0, 0], sizes = [286, 6], strides = [1, 1]} : vector<324x6xf32> to vector<286x6xf32>
    %4 = arith.truncf %3 : vector<286x6xf32> to vector<286x6xbf16>
    %c0_2 = arith.constant 0 : index
    %c0_3 = arith.constant 0 : index
    %c0_4 = arith.constant 0 : index
    %5 = vector.load %arg3[%c0_2, %c0_3, %c0_4] : memref<9x6x32xbf16, #tpu.memory_space<vmem>>, vector<1x6x32xbf16>
    %6 = vector.shape_cast %5 : vector<1x6x32xbf16> to vector<6x32xbf16>
    %cst = arith.constant dense<0.000000e+00> : vector<286x32xf32>
    %7 = tpu.matmul %4, %6, %cst {dimension_numbers = #tpu.dot_dimension_numbers<[1], [0], [0], [1], [0, 0, 1, 1], [], []>} : vector<286x6xbf16>, vector<6x32xbf16>, vector<286x32xf32> -> vector<286x32xf32>
    %8 = vector.extract_strided_slice %2 {offsets = [1, 0], sizes = [286, 6], strides = [1, 1]} : vector<324x6xf32> to vector<286x6xf32>
    %9 = arith.truncf %8 : vector<286x6xf32> to vector<286x6xbf16>
    %c1 = arith.constant 1 : index
    %c0_5 = arith.constant 0 : index
    %c0_6 = arith.constant 0 : index
    %10 = vector.load %arg3[%c1, %c0_5, %c0_6] : memref<9x6x32xbf16, #tpu.memory_space<vmem>>, vector<1x6x32xbf16>
    %11 = vector.shape_cast %10 : vector<1x6x32xbf16> to vector<6x32xbf16>
    %cst_7 = arith.constant dense<0.000000e+00> : vector<286x32xf32>
    %12 = tpu.matmul %9, %11, %cst_7 {dimension_numbers = #tpu.dot_dimension_numbers<[1], [0], [0], [1], [0, 0, 1, 1], [], []>} : vector<286x6xbf16>, vector<6x32xbf16>, vector<286x32xf32> -> vector<286x32xf32>
    %13 = arith.addf %7, %12 : vector<286x32xf32>
    %14 = vector.extract_strided_slice %2 {offsets = [2, 0], sizes = [286, 6], strides = [1, 1]} : vector<324x6xf32> to vector<286x6xf32>
    %15 = arith.truncf %14 : vector<286x6xf32> to vector<286x6xbf16>
    %c2 = arith.constant 2 : index
    %c0_8 = arith.constant 0 : index
    %c0_9 = arith.constant 0 : index
    %16 = vector.load %arg3[%c2, %c0_8, %c0_9] : memref<9x6x32xbf16, #tpu.memory_space<vmem>>, vector<1x6x32xbf16>
    %17 = vector.shape_cast %16 : vector<1x6x32xbf16> to vector<6x32xbf16>
    %cst_10 = arith.constant dense<0.000000e+00> : vector<286x32xf32>
    %18 = tpu.matmul %15, %17, %cst_10 {dimension_numbers = #tpu.dot_dimension_numbers<[1], [0], [0], [1], [0, 0, 1, 1], [], []>} : vector<286x6xbf16>, vector<6x32xbf16>, vector<286x32xf32> -> vector<286x32xf32>
    %19 = arith.addf %13, %18 : vector<286x32xf32>
    %20 = vector.extract_strided_slice %2 {offsets = [18, 0], sizes = [286, 6], strides = [1, 1]} : vector<324x6xf32> to vector<286x6xf32>
    %21 = arith.truncf %20 : vector<286x6xf32> to vector<286x6xbf16>
    %c3 = arith.constant 3 : index
    %c0_11 = arith.constant 0 : index
    %c0_12 = arith.constant 0 : index
    %22 = vector.load %arg3[%c3, %c0_11, %c0_12] : memref<9x6x32xbf16, #tpu.memory_space<vmem>>, vector<1x6x32xbf16>
    %23 = vector.shape_cast %22 : vector<1x6x32xbf16> to vector<6x32xbf16>
    %cst_13 = arith.constant dense<0.000000e+00> : vector<286x32xf32>
    %24 = tpu.matmul %21, %23, %cst_13 {dimension_numbers = #tpu.dot_dimension_numbers<[1], [0], [0], [1], [0, 0, 1, 1], [], []>} : vector<286x6xbf16>, vector<6x32xbf16>, vector<286x32xf32> -> vector<286x32xf32>
    %25 = arith.addf %19, %24 : vector<286x32xf32>
    %26 = vector.extract_strided_slice %2 {offsets = [19, 0], sizes = [286, 6], strides = [1, 1]} : vector<324x6xf32> to vector<286x6xf32>
    %27 = arith.truncf %26 : vector<286x6xf32> to vector<286x6xbf16>
    %c4 = arith.constant 4 : index
    %c0_14 = arith.constant 0 : index
    %c0_15 = arith.constant 0 : index
    %28 = vector.load %arg3[%c4, %c0_14, %c0_15] : memref<9x6x32xbf16, #tpu.memory_space<vmem>>, vector<1x6x32xbf16>
    %29 = vector.shape_cast %28 : vector<1x6x32xbf16> to vector<6x32xbf16>
    %cst_16 = arith.constant dense<0.000000e+00> : vector<286x32xf32>
    %30 = tpu.matmul %27, %29, %cst_16 {dimension_numbers = #tpu.dot_dimension_numbers<[1], [0], [0], [1], [0, 0, 1, 1], [], []>} : vector<286x6xbf16>, vector<6x32xbf16>, vector<286x32xf32> -> vector<286x32xf32>
    %31 = arith.addf %25, %30 : vector<286x32xf32>
    %32 = vector.extract_strided_slice %2 {offsets = [20, 0], sizes = [286, 6], strides = [1, 1]} : vector<324x6xf32> to vector<286x6xf32>
    %33 = arith.truncf %32 : vector<286x6xf32> to vector<286x6xbf16>
    %c5 = arith.constant 5 : index
    %c0_17 = arith.constant 0 : index
    %c0_18 = arith.constant 0 : index
    %34 = vector.load %arg3[%c5, %c0_17, %c0_18] : memref<9x6x32xbf16, #tpu.memory_space<vmem>>, vector<1x6x32xbf16>
    %35 = vector.shape_cast %34 : vector<1x6x32xbf16> to vector<6x32xbf16>
    %cst_19 = arith.constant dense<0.000000e+00> : vector<286x32xf32>
    %36 = tpu.matmul %33, %35, %cst_19 {dimension_numbers = #tpu.dot_dimension_numbers<[1], [0], [0], [1], [0, 0, 1, 1], [], []>} : vector<286x6xbf16>, vector<6x32xbf16>, vector<286x32xf32> -> vector<286x32xf32>
    %37 = arith.addf %31, %36 : vector<286x32xf32>
    %38 = vector.extract_strided_slice %2 {offsets = [36, 0], sizes = [286, 6], strides = [1, 1]} : vector<324x6xf32> to vector<286x6xf32>
    %39 = arith.truncf %38 : vector<286x6xf32> to vector<286x6xbf16>
    %c6 = arith.constant 6 : index
    %c0_20 = arith.constant 0 : index
    %c0_21 = arith.constant 0 : index
    %40 = vector.load %arg3[%c6, %c0_20, %c0_21] : memref<9x6x32xbf16, #tpu.memory_space<vmem>>, vector<1x6x32xbf16>
    %41 = vector.shape_cast %40 : vector<1x6x32xbf16> to vector<6x32xbf16>
    %cst_22 = arith.constant dense<0.000000e+00> : vector<286x32xf32>
    %42 = tpu.matmul %39, %41, %cst_22 {dimension_numbers = #tpu.dot_dimension_numbers<[1], [0], [0], [1], [0, 0, 1, 1], [], []>} : vector<286x6xbf16>, vector<6x32xbf16>, vector<286x32xf32> -> vector<286x32xf32>
    %43 = arith.addf %37, %42 : vector<286x32xf32>
    %44 = vector.extract_strided_slice %2 {offsets = [37, 0], sizes = [286, 6], strides = [1, 1]} : vector<324x6xf32> to vector<286x6xf32>
    %45 = arith.truncf %44 : vector<286x6xf32> to vector<286x6xbf16>
    %c7 = arith.constant 7 : index
    %c0_23 = arith.constant 0 : index
    %c0_24 = arith.constant 0 : index
    %46 = vector.load %arg3[%c7, %c0_23, %c0_24] : memref<9x6x32xbf16, #tpu.memory_space<vmem>>, vector<1x6x32xbf16>
    %47 = vector.shape_cast %46 : vector<1x6x32xbf16> to vector<6x32xbf16>
    %cst_25 = arith.constant dense<0.000000e+00> : vector<286x32xf32>
    %48 = tpu.matmul %45, %47, %cst_25 {dimension_numbers = #tpu.dot_dimension_numbers<[1], [0], [0], [1], [0, 0, 1, 1], [], []>} : vector<286x6xbf16>, vector<6x32xbf16>, vector<286x32xf32> -> vector<286x32xf32>
    %49 = arith.addf %43, %48 : vector<286x32xf32>
    %50 = vector.extract_strided_slice %2 {offsets = [38, 0], sizes = [286, 6], strides = [1, 1]} : vector<324x6xf32> to vector<286x6xf32>
    %51 = arith.truncf %50 : vector<286x6xf32> to vector<286x6xbf16>
    %c8 = arith.constant 8 : index
    %c0_26 = arith.constant 0 : index
    %c0_27 = arith.constant 0 : index
    %52 = vector.load %arg3[%c8, %c0_26, %c0_27] : memref<9x6x32xbf16, #tpu.memory_space<vmem>>, vector<1x6x32xbf16>
    %53 = vector.shape_cast %52 : vector<1x6x32xbf16> to vector<6x32xbf16>
    %cst_28 = arith.constant dense<0.000000e+00> : vector<286x32xf32>
    %54 = tpu.matmul %51, %53, %cst_28 {dimension_numbers = #tpu.dot_dimension_numbers<[1], [0], [0], [1], [0, 0, 1, 1], [], []>} : vector<286x6xbf16>, vector<6x32xbf16>, vector<286x32xf32> -> vector<286x32xf32>
    %55 = arith.addf %49, %54 : vector<286x32xf32>
    %c0_29 = arith.constant 0 : index
    %c0_30 = arith.constant 0 : index
    %56 = vector.load %arg4[%c0_29, %c0_30] : memref<1x32xf32, #tpu.memory_space<vmem>>, vector<1x32xf32>
    %57 = vector.broadcast %56 : vector<1x32xf32> to vector<286x32xf32>
    %58 = arith.addf %55, %57 : vector<286x32xf32>
    %cst_31 = arith.constant 0.000000e+00 : f32
    %59 = vector.broadcast %cst_31 : f32 to vector<286x32xf32>
    %60 = arith.cmpf ogt, %58, %59 : vector<286x32xf32>
    %cst_32 = arith.constant 2.000000e-01 : f32
    %61 = vector.broadcast %cst_32 : f32 to vector<286x32xf32>
    %62 = arith.mulf %61, %58 : vector<286x32xf32>
    %63 = arith.select %60, %58, %62 : vector<286x32xi1>, vector<286x32xf32>
    %c0_33 = arith.constant 0 : index
    %c0_34 = arith.constant 0 : index
    %64 = vector.load %arg5[%c0_33, %c0_34] : memref<1x32xf32, #tpu.memory_space<vmem>>, vector<1x32xf32>
    %65 = vector.broadcast %64 : vector<1x32xf32> to vector<286x32xf32>
    %66 = arith.mulf %63, %65 : vector<286x32xf32>
    %cst_35 = arith.constant dense<0.000000e+00> : vector<286xf32>
    %67 = vector.multi_reduction <add>, %66, %cst_35 [1] : vector<286x32xf32> to vector<286xf32>
    %68 = vector.shape_cast %67 : vector<286xf32> to vector<286x1xf32>
    %c0_36 = arith.constant 0 : index
    %c0_37 = arith.constant 0 : index
    %69 = vector.load %arg6[%c0_36, %c0_37] : memref<1x1xf32, #tpu.memory_space<vmem>>, vector<1x1xf32>
    %70 = vector.broadcast %69 : vector<1x1xf32> to vector<286x1xf32>
    %71 = arith.addf %68, %70 : vector<286x1xf32>
    %c2_i32 = arith.constant 2 : i32
    %72 = arith.cmpi slt, %arg0, %c2_i32 : i32
    %73 = arith.extui %72 : i1 to i32
    %74 = arith.sitofp %73 : i32 to f32
    %c0_38 = arith.constant 0 : index
    %c0_39 = arith.constant 0 : index
    %75 = vector.load %arg2[%c0_38, %c0_39] : memref<286x1xf32, #tpu.memory_space<vmem>>, vector<286x1xf32>
    %76 = vector.broadcast %74 : f32 to vector<286x1xf32>
    %77 = arith.subf %76, %71 : vector<286x1xf32>
    %78 = arith.mulf %77, %77 : vector<286x1xf32>
    %79 = arith.mulf %75, %78 : vector<286x1xf32>
    %80 = vector.shape_cast %79 : vector<286x1xf32> to vector<1x286x1xf32>
    %cst_40 = arith.constant dense<0.000000e+00> : vector<1xf32>
    %81 = vector.multi_reduction <add>, %80, %cst_40 [1, 2] : vector<1x286x1xf32> to vector<1xf32>
    %82 = vector.shape_cast %81 : vector<1xf32> to vector<1x1x1xf32>
    %83 = vector.extract %82[0, 0, 0] : f32 from vector<1x1x1xf32>
    %84 = tpu.iota {dimensions = array<i32: 1>} : vector<1x128xi32>
    %c0_i32 = arith.constant 0 : i32
    %85 = vector.broadcast %c0_i32 : i32 to vector<1x128xi32>
    %86 = arith.cmpi eq, %84, %85 : vector<1x128xi32>
    %cst_41 = arith.constant 0.000000e+00 : f32
    %87 = vector.broadcast %83 : f32 to vector<1x128xf32>
    %88 = vector.broadcast %cst_41 : f32 to vector<1x128xf32>
    %89 = arith.select %86, %87, %88 : vector<1x128xi1>, vector<1x128xf32>
    %c0_42 = arith.constant 0 : index
    %c0_43 = arith.constant 0 : index
    %90 = vector.load %arg7[%c0_42, %c0_43] : memref<1x128xf32, #tpu.memory_space<vmem>>, vector<1x128xf32>
    tpu.vector_store %arg7[%c0_42, %c0_43], %89 {strides = array<i32>} : memref<1x128xf32, #tpu.memory_space<vmem>>, vector<1x128xf32>,
    return
  }
  func.func @transform_0(%arg0: i32) -> (i32, i32, i32) {
    %c0_i32 = arith.constant 0 : i32
    %c0_i32_0 = arith.constant 0 : i32
    %c0_i32_1 = arith.constant 0 : i32
    return %arg0, %c0_i32, %c0_i32_0 : i32, i32, i32
  }
  func.func @transform_1(%arg0: i32) -> (i32, i32) {
    %c0_i32 = arith.constant 0 : i32
    %c0_i32_0 = arith.constant 0 : i32
    %c0_i32_1 = arith.constant 0 : i32
    return %c0_i32, %c0_i32_0 : i32, i32
  }
  func.func @transform_2(%arg0: i32) -> (i32, i32, i32) {
    %c0_i32 = arith.constant 0 : i32
    %c0_i32_0 = arith.constant 0 : i32
    %c0_i32_1 = arith.constant 0 : i32
    %c0_i32_2 = arith.constant 0 : i32
    return %c0_i32, %c0_i32_0, %c0_i32_1 : i32, i32, i32
  }
  func.func @transform_3(%arg0: i32) -> (i32, i32) {
    %c0_i32 = arith.constant 0 : i32
    %c0_i32_0 = arith.constant 0 : i32
    %c0_i32_1 = arith.constant 0 : i32
    return %c0_i32, %c0_i32_0 : i32, i32
  }
  func.func @transform_4(%arg0: i32) -> (i32, i32) {
    %c0_i32 = arith.constant 0 : i32
    %c0_i32_0 = arith.constant 0 : i32
    %c0_i32_1 = arith.constant 0 : i32
    return %c0_i32, %c0_i32_0 : i32, i32
  }
  func.func @transform_5(%arg0: i32) -> (i32, i32) {
    %c0_i32 = arith.constant 0 : i32
    %c0_i32_0 = arith.constant 0 : i32
    %c0_i32_1 = arith.constant 0 : i32
    return %c0_i32, %c0_i32_0 : i32, i32
  }
  func.func @transform_6(%arg0: i32) -> (i32, i32) {
    %c0_i32 = arith.constant 0 : i32
    %c0_i32_0 = arith.constant 0 : i32
    return %c0_i32, %arg0 : i32, i32
  }
}

</mosaic_0001>

<llo_original>
// kernel: tpu_custom_call.1
$region0: #{tpu_custom_call.1}
  #allocation0 [shape = 'u32[]', space=smem, size = 0x4, offset = 0x4, fixed_abs, tag = 'smem constant byte address 0x4 - core index']
  #allocation1 [shape = 'u32[72,128]{1,0:T(1,128)}', space=vmem, size = 0x9000, scoped, tag = 'internal scratch']
  #allocation2 [shape = 'f32[1,1]{1,0:T(1,128)S(1)}', space=vmem, size = 0x200, scoped, tag = 'scoped memory for tpu_custom_call.1']
  %s0 = inlined_call_operand.vmem [shape: bf16[4,324,6], index: 0, kind: input, shape index: {}]
  %s1 = inlined_call_operand.vmem [shape: f32[286,1], index: 1, kind: input, shape index: {}]
  %s2 = inlined_call_operand.vmem [shape: bf16[9,6,32], index: 2, kind: input, shape index: {}]
  %s3 = inlined_call_operand.vmem [shape: f32[1,32], index: 3, kind: input, shape index: {}]
  %s4 = inlined_call_operand.vmem [shape: f32[1,32], index: 4, kind: input, shape index: {}]
  %s5 = inlined_call_operand.<no memory space> [shape: f32[1,1], index: 5, kind: input, shape index: {}]
  %s6 = inlined_call_operand.hbm [shape: f32[1,512], index: 6, kind: output, shape index: {}]
  %s7 = sld [smem:[#allocation0]]
  $region57: #{tpu_custom_call.1} parent=0
    _
  %s9 = ssub.s32 1, %s7
  %s10 = scalar_select 0, %s9, %s7
  %v11 = vstv %s5
  %12 = vst [vmem:[#allocation2] sm:$0x1] %v11
  $region1: #{tpu_custom_call.1} parent=0
    #allocation3 [shape = 'u8[1024]{0}', space=vmem, size = 0x400, scoped, tag = 'output window, operand 0']
    #allocation4 [shape = 's32[2]{0}', space=sflag, size = 0x8, scoped, tag = 'scoped memory for tpu_custom_call.1']
    %13 = vsyncpa [#allocation4], 0
    %s14 = scalar_lea.sflag [#allocation4], 1
    %15 = vsyncpa %s14, 0
    loop: start=0, step=1, limit=6
    $region2: #{tpu_custom_call.1} parent=1 // loop_pre_header
      _
    $region3: #{tpu_custom_call.1} parent=1 // loop_header
      %s17 = sphi 0, %s21
      %p18 = scmp.ge.s32.totalorder %s17, 6
      %s27 = sphi 0, %s29
      %s30 = sphi 0, %s27
      %s31 = sphi 0, %s30
      %s47 = sphi 0, %s31
      %s51 = sphi 0, %s51
      %s53 = sphi 0, %s51
      %s54 = sphi 0, %s53
      %s68 = sphi 0, %s54
      %s72 = sphi 0, %s72
      %s74 = sphi 0, %s72
      %s75 = sphi 0, %s74
      %s89 = sphi 0, %s75
      %s93 = sphi 0, %s93
      %s95 = sphi 0, %s93
      %s96 = sphi 0, %s95
      %s110 = sphi 0, %s96
      %s114 = sphi 0, %s114
      %s116 = sphi 0, %s114
      %s117 = sphi 0, %s116
      %s131 = sphi 0, %s117
      %s135 = sphi 0, %s135
      %s137 = sphi 0, %s135
      %s138 = sphi 0, %s137
      %s152 = sphi 0, %s138
      %s158 = sphi 0, %s160
      %s161 = sphi 0, %s158
      %s162 = sphi 0, %s161
      %s178 = sphi 0, %s162
    $region4: #{tpu_custom_call.1} parent=1 // loop_header_branch
      %20 = sbr.rel (%p18) target = $region8
    $region5: #{tpu_custom_call.1} parent=1 // loop_body
      %s22 = ssub.s32 %s17, 1
      %s23 = ssub.s32 %s17, 2
      %s24 = sadd.s32 %s17, 1
      %s25 = ssub.s32 %s17, %s24
      %p26 = scmp.eq.s32.totalorder %s25, 0
      %s28 = sadd.s32 %s27, 1
      %s29 = scalar_select %p26, %s27, %s28
      %p32 = pneg %p26
      %p33 = scmp.eq.s32.totalorder %s17, 3
      %p34 = por %p32, %p33
      %p35 = scmp.ne.s32.totalorder %s27, %s30
      %p36 = scmp.eq.s32.totalorder %s17, 0
      %p37 = por %p35, %p36
      %p38 = scmp.ne.s32.totalorder %s27, %s30
      %p39 = scmp.eq.s32.totalorder %s22, 3
      %p40 = por %p38, %p39
      %p41 = scmp.ne.s32.totalorder %s30, %s31
      %p42 = scmp.eq.s32.totalorder %s22, 0
      %p43 = por %p41, %p42
      %p44 = scmp.ne.s32.totalorder %s30, %s31
      %p45 = scmp.eq.s32.totalorder %s23, 3
      %p46 = por %p44, %p45
      %p48 = scmp.ne.s32.totalorder %s31, %s47
      %p49 = scmp.eq.s32.totalorder %s23, 0
      %p50 = por %p48, %p49
      %s52 = sadd.s32 %s51, 1
      %p55 = scmp.eq.s32.totalorder %s17, 3
      %p56 = scmp.ne.s32.totalorder %s51, %s53
      %p57 = scmp.eq.s32.totalorder %s17, 0
      %p58 = por %p56, %p57
      %p59 = scmp.ne.s32.totalorder %s51, %s53
      %p60 = scmp.eq.s32.totalorder %s22, 3
      %p61 = por %p59, %p60
      %p62 = scmp.ne.s32.totalorder %s53, %s54
      %p63 = scmp.eq.s32.totalorder %s22, 0
      %p64 = por %p62, %p63
      %p65 = scmp.ne.s32.totalorder %s53, %s54
      %p66 = scmp.eq.s32.totalorder %s23, 3
      %p67 = por %p65, %p66
      %p69 = scmp.ne.s32.totalorder %s54, %s68
      %p70 = scmp.eq.s32.totalorder %s23, 0
      %p71 = por %p69, %p70
      %s73 = sadd.s32 %s72, 1
      %p76 = scmp.eq.s32.totalorder %s17, 3
      %p77 = scmp.ne.s32.totalorder %s72, %s74
      %p78 = scmp.eq.s32.totalorder %s17, 0
      %p79 = por %p77, %p78
      %p80 = scmp.ne.s32.totalorder %s72, %s74
      %p81 = scmp.eq.s32.totalorder %s22, 3
      %p82 = por %p80, %p81
      %p83 = scmp.ne.s32.totalorder %s74, %s75
      %p84 = scmp.eq.s32.totalorder %s22, 0
      %p85 = por %p83, %p84
      %p86 = scmp.ne.s32.totalorder %s74, %s75
      %p87 = scmp.eq.s32.totalorder %s23, 3
      %p88 = por %p86, %p87
      %p90 = scmp.ne.s32.totalorder %s75, %s89
      %p91 = scmp.eq.s32.totalorder %s23, 0
      %p92 = por %p90, %p91
      %s94 = sadd.s32 %s93, 1
      %p97 = scmp.eq.s32.totalorder %s17, 3
      %p98 = scmp.ne.s32.totalorder %s93, %s95
      %p99 = scmp.eq.s32.totalorder %s17, 0
      %p100 = por %p98, %p99
      %p101 = scmp.ne.s32.totalorder %s93, %s95
      %p102 = scmp.eq.s32.totalorder %s22, 3
      %p103 = por %p101, %p102
      %p104 = scmp.ne.s32.totalorder %s95, %s96
      %p105 = scmp.eq.s32.totalorder %s22, 0
      %p106 = por %p104, %p105
      %p107 = scmp.ne.s32.totalorder %s95, %s96
      %p108 = scmp.eq.s32.totalorder %s23, 3
      %p109 = por %p107, %p108
      %p111 = scmp.ne.s32.totalorder %s96, %s110
      %p112 = scmp.eq.s32.totalorder %s23, 0
      %p113 = por %p111, %p112
      %s115 = sadd.s32 %s114, 1
      %p118 = scmp.eq.s32.totalorder %s17, 3
      %p119 = scmp.ne.s32.totalorder %s114, %s116
      %p120 = scmp.eq.s32.totalorder %s17, 0
      %p121 = por %p119, %p120
      %p122 = scmp.ne.s32.totalorder %s114, %s116
      %p123 = scmp.eq.s32.totalorder %s22, 3
      %p124 = por %p122, %p123
      %p125 = scmp.ne.s32.totalorder %s116, %s117
      %p126 = scmp.eq.s32.totalorder %s22, 0
      %p127 = por %p125, %p126
      %p128 = scmp.ne.s32.totalorder %s116, %s117
      %p129 = scmp.eq.s32.totalorder %s23, 3
      %p130 = por %p128, %p129
      %p132 = scmp.ne.s32.totalorder %s117, %s131
      %p133 = scmp.eq.s32.totalorder %s23, 0
      %p134 = por %p132, %p133
      %s136 = sadd.s32 %s135, 1
      %p139 = scmp.eq.s32.totalorder %s17, 3
      %p140 = scmp.ne.s32.totalorder %s135, %s137
      %p141 = scmp.eq.s32.totalorder %s17, 0
      %p142 = por %p140, %p141
      %p143 = scmp.ne.s32.totalorder %s135, %s137
      %p144 = scmp.eq.s32.totalorder %s22, 3
      %p145 = por %p143, %p144
      %p146 = scmp.ne.s32.totalorder %s137, %s138
      %p147 = scmp.eq.s32.totalorder %s22, 0
      %p148 = por %p146, %p147
      %p149 = scmp.ne.s32.totalorder %s137, %s138
      %p150 = scmp.eq.s32.totalorder %s23, 3
      %p151 = por %p149, %p150
      %p153 = scmp.ne.s32.totalorder %s138, %s152
      %p154 = scmp.eq.s32.totalorder %s23, 0
      %p155 = por %p153, %p154
      %s156 = ssub.s32 %s17, %s24
      %p157 = scmp.eq.s32.totalorder %s156, 0
      %s159 = sadd.s32 %s158, 1
      %s160 = scalar_select %p157, %s158, %s159
      %p163 = pneg %p157
      %p164 = scmp.eq.s32.totalorder %s17, 3
      %p165 = por %p163, %p164
      %p166 = scmp.ne.s32.totalorder %s158, %s161
      %p167 = scmp.eq.s32.totalorder %s17, 0
      %p168 = por %p166, %p167
      %p169 = scmp.ne.s32.totalorder %s158, %s161
      %p170 = scmp.eq.s32.totalorder %s22, 3
      %p171 = por %p169, %p170
      %p172 = scmp.ne.s32.totalorder %s161, %s162
      %p173 = scmp.eq.s32.totalorder %s22, 0
      %p174 = por %p172, %p173
      %p175 = scmp.ne.s32.totalorder %s161, %s162
      %p176 = scmp.eq.s32.totalorder %s23, 3
      %p177 = por %p175, %p176
      %p179 = scmp.ne.s32.totalorder %s162, %s178
      %p180 = scmp.eq.s32.totalorder %s23, 0
      %p181 = por %p179, %p180
      %p182 = scmp.le.s32.totalorder 1, %s17
      %p183 = scmp.lt.s32.totalorder %s17, 5
      %p184 = pnand %p182, %p183
      %p185 = pneg %p184
      // Predicated region
      $region9: #{tpu_custom_call.1} parent=5 // pred_check
        _
      $region10: #{tpu_custom_call.1} parent=5 // pred_check_branch
        %187 = sbr.rel (%p184) target = $region12
      $region11: #{tpu_custom_call.1} parent=5 // pred_region
        %s188 = ssub.s32 %s17, 1
        // Predicated region
        $region13: #{tpu_custom_call.1} parent=11 // pred_check
          %p189 = pneg %p64
        $region14: #{tpu_custom_call.1} parent=11 // pred_check_branch
          %191 = sbr.rel (%p189) target = $region16
        $region15: #{tpu_custom_call.1} parent=11 // pred_region
          _
        $region16: #{tpu_custom_call.1} parent=11 // pred_fallthru
          _
        // Predicated region
        $region17: #{tpu_custom_call.1} parent=11 // pred_check
          %p192 = pneg %p85
        $region18: #{tpu_custom_call.1} parent=11 // pred_check_branch
          %194 = sbr.rel (%p192) target = $region20
        $region19: #{tpu_custom_call.1} parent=11 // pred_region
          _
        $region20: #{tpu_custom_call.1} parent=11 // pred_fallthru
          _
        // Predicated region
        $region21: #{tpu_custom_call.1} parent=11 // pred_check
          %p195 = pneg %p106
        $region22: #{tpu_custom_call.1} parent=11 // pred_check_branch
          %197 = sbr.rel (%p195) target = $region24
        $region23: #{tpu_custom_call.1} parent=11 // pred_region
          _
        $region24: #{tpu_custom_call.1} parent=11 // pred_fallthru
          _
        // Predicated region
        $region25: #{tpu_custom_call.1} parent=11 // pred_check
          %p198 = pneg %p127
        $region26: #{tpu_custom_call.1} parent=11 // pred_check_branch
          %200 = sbr.rel (%p198) target = $region28
        $region27: #{tpu_custom_call.1} parent=11 // pred_region
          _
        $region28: #{tpu_custom_call.1} parent=11 // pred_fallthru
          _
        // Predicated region
        $region29: #{tpu_custom_call.1} parent=11 // pred_check
          %p201 = pneg %p148
        $region30: #{tpu_custom_call.1} parent=11 // pred_check_branch
          %203 = sbr.rel (%p201) target = $region32
        $region31: #{tpu_custom_call.1} parent=11 // pred_region
          _
        $region32: #{tpu_custom_call.1} parent=11 // pred_fallthru
          _
      $region12: #{tpu_custom_call.1} parent=5 // pred_fallthru
        _
      %p204 = scmp.lt.s32.totalorder %s17, 4
      // Predicated region
      $region33: #{tpu_custom_call.1} parent=5 // pred_check
        %p205 = pneg %p204
      $region34: #{tpu_custom_call.1} parent=5 // pred_check_branch
        %207 = sbr.rel (%p205) target = $region36
      $region35: #{tpu_custom_call.1} parent=5 // pred_region
        // Predicated region
        $region37: #{tpu_custom_call.1} parent=35 // pred_check
          %p208 = pneg %p37
        $region38: #{tpu_custom_call.1} parent=35 // pred_check_branch
          %210 = sbr.rel (%p208) target = $region40
        $region39: #{tpu_custom_call.1} parent=35 // pred_region
          %p211 = scmp.lt.s32.totalorder %s17, 3
          %s212 = scalar_select %p211, %s17, 3
          %s213 = smul.addr %s212, 41
          %s214 = smul.addr %s213, 4
          %s215 = scalar_lea.vmem %s0, %s214
        $region40: #{tpu_custom_call.1} parent=35 // pred_fallthru
          _
      $region36: #{tpu_custom_call.1} parent=5 // pred_fallthru
        _
      %p216 = scmp.le.s32.totalorder 1, %s17
      %p217 = scmp.lt.s32.totalorder %s17, 5
      %p218 = pnand %p216, %p217
      %p219 = pneg %p218
      // Predicated region
      $region41: #{tpu_custom_call.1} parent=5 // pred_check
        _
      $region42: #{tpu_custom_call.1} parent=5 // pred_check_branch
        %221 = sbr.rel (%p218) target = $region44
      $region43: #{tpu_custom_call.1} parent=5 // pred_region
        %s222 = ssub.s32 %s17, 1
        %p223 = scmp.lt.s32.totalorder %s22, 3
        %s224 = scalar_select %p223, %s22, 3
        %s225 = smul.addr %s224, 41
        %s226 = smul.addr %s225, 4
        %s227 = scalar_lea.vmem %s0, %s226
        %p228 = pneg %p43
        %p229 = pneg %p40
        %p230 = pneg %p64
        %p231 = pneg %p61
        %p232 = pneg %p85
        %p233 = pneg %p82
        %p234 = pneg %p106
        %p235 = pneg %p103
        %p236 = pneg %p127
        %p237 = pneg %p124
        %p238 = pneg %p148
        %p239 = pneg %p145
        %p240 = pneg %p174
        %p241 = pneg %p171
        %s242 = sand.u32 %s161, 1
        %s243 = scalar_lea.sflag [#allocation4], %s242
        %s244 = sand.u32 %s161, 1
        %s245 = scalar_lea.vmem [#allocation3], %s244
        %p246 = scmp.lt.s32.totalorder %s22, 3
        %s247 = scalar_select %p246, %s22, 3
        %s248 = smul.addr %s247, 41
        %s249 = smul.addr %s248, 4
        %s250 = scalar_lea.vmem %s0, %s249
        %v252 = vld [vmem:[%s250] sm:$0xf]
        %v253 = vld [vmem:[%s250 + $0x4] sm:$0xf]
        %v254 = vld [vmem:[%s250 + $0x8] sm:$0xf]
        %v255 = vld [vmem:[%s250 + $0xc] sm:$0xf]
        %v256 = vld [vmem:[%s250 + $0x10] sm:$0xf]
        %v257 = vld [vmem:[%s250 + $0x14] sm:$0xf]
        %v258 = vld [vmem:[%s250 + $0x18] sm:$0xf]
        %v259 = vld [vmem:[%s250 + $0x1c] sm:$0xf]
        %v260 = vld [vmem:[%s250 + $0x20] sm:$0xf]
        %v261 = vld [vmem:[%s250 + $0x24] sm:$0xf]
        %v262 = vld [vmem:[%s250 + $0x28] sm:$0xf]
        %v263 = vld [vmem:[%s250 + $0x2c] sm:$0xf]
        %v264 = vld [vmem:[%s250 + $0x30] sm:$0xf]
        %v265 = vld [vmem:[%s250 + $0x34] sm:$0xf]
        %v266 = vld [vmem:[%s250 + $0x38] sm:$0xf]
        %v267 = vld [vmem:[%s250 + $0x3c] sm:$0xf]
        %v268 = vld [vmem:[%s250 + $0x40] sm:$0xf]
        %v269 = vld [vmem:[%s250 + $0x44] sm:$0xf]
        %v270 = vld [vmem:[%s250 + $0x48] sm:$0xf]
        %v271 = vld [vmem:[%s250 + $0x4c] sm:$0xf]
        %v272 = vld [vmem:[%s250 + $0x50] sm:$0xf]
        %v273 = vld [vmem:[%s250 + $0x54] sm:$0xf]
        %v274 = vld [vmem:[%s250 + $0x58] sm:$0xf]
        %v275 = vld [vmem:[%s250 + $0x5c] sm:$0xf]
        %v276 = vld [vmem:[%s250 + $0x60] sm:$0xf]
        %v277 = vld [vmem:[%s250 + $0x64] sm:$0xf]
        %v278 = vld [vmem:[%s250 + $0x68] sm:$0xf]
        %v279 = vld [vmem:[%s250 + $0x6c] sm:$0xf]
        %v280 = vld [vmem:[%s250 + $0x70] sm:$0xf]
        %v281 = vld [vmem:[%s250 + $0x74] sm:$0xf]
        %v282 = vld [vmem:[%s250 + $0x78] sm:$0xf]
        %v283 = vld [vmem:[%s250 + $0x7c] sm:$0xf]
        %v284 = vld [vmem:[%s250 + $0x80] sm:$0xf]
        %v285 = vld [vmem:[%s250 + $0x84] sm:$0xf]
        %v286 = vld [vmem:[%s250 + $0x88] sm:$0xf]
        %v287 = vld [vmem:[%s250 + $0x8c] sm:$0xf]
        %v288 = vld [vmem:[%s250 + $0x90] sm:$0xf]
        %v289 = vld [vmem:[%s250 + $0x94] sm:$0xf]
        %v290 = vld [vmem:[%s250 + $0x98] sm:$0xf]
        %v291 = vld [vmem:[%s250 + $0x9c] sm:$0xf]
        %v292 = vld [vmem:[%s250 + $0xa0] sm:$0x3]
        %v293 = vunpack.c.l.bf16 %v252
        %v294 = vunpack.c.l.bf16 %v253
        %v295 = vunpack.c.l.bf16 %v254
        %v296 = vunpack.c.l.bf16 %v255
        %v297 = vunpack.c.l.bf16 %v256
        %v298 = vunpack.c.l.bf16 %v257
        %v299 = vunpack.c.l.bf16 %v258
        %v300 = vunpack.c.l.bf16 %v259
        %v301 = vunpack.c.l.bf16 %v260
        %v302 = vunpack.c.l.bf16 %v261
        %v303 = vunpack.c.l.bf16 %v262
        %v304 = vunpack.c.l.bf16 %v263
        %v305 = vunpack.c.l.bf16 %v264
        %v306 = vunpack.c.l.bf16 %v265
        %v307 = vunpack.c.l.bf16 %v266
        %v308 = vunpack.c.l.bf16 %v267
        %v309 = vunpack.c.l.bf16 %v268
        %v310 = vunpack.c.l.bf16 %v269
        %v311 = vunpack.c.l.bf16 %v270
        %v312 = vunpack.c.l.bf16 %v271
        %v313 = vunpack.c.l.bf16 %v272
        %v314 = vunpack.c.l.bf16 %v273
        %v315 = vunpack.c.l.bf16 %v274
        %v316 = vunpack.c.l.bf16 %v275
        %v317 = vunpack.c.l.bf16 %v276
        %v318 = vunpack.c.l.bf16 %v277
        %v319 = vunpack.c.l.bf16 %v278
        %v320 = vunpack.c.l.bf16 %v279
        %v321 = vunpack.c.l.bf16 %v280
        %v322 = vunpack.c.l.bf16 %v281
        %v323 = vunpack.c.l.bf16 %v282
        %v324 = vunpack.c.l.bf16 %v283
        %v325 = vunpack.c.l.bf16 %v284
        %v326 = vunpack.c.l.bf16 %v285
        %v327 = vunpack.c.l.bf16 %v286
        %v328 = vunpack.c.l.bf16 %v287
        %v329 = vunpack.c.l.bf16 %v288
        %v330 = vunpack.c.l.bf16 %v289
        %v331 = vunpack.c.l.bf16 %v290
        %v332 = vunpack.c.l.bf16 %v291
        %v333 = vunpack.c.l.bf16 %v292
        %v334 = vpack.c.bf16 %v294, %v293
        %v335 = vpack.c.bf16 %v296, %v295
        %v336 = vpack.c.bf16 %v298, %v297
        %v337 = vpack.c.bf16 %v300, %v299
        %v338 = vpack.c.bf16 %v302, %v301
        %v339 = vpack.c.bf16 %v304, %v303
        %v340 = vpack.c.bf16 %v306, %v305
        %v341 = vpack.c.bf16 %v308, %v307
        %v342 = vpack.c.bf16 %v310, %v309
        %v343 = vpack.c.bf16 %v312, %v311
        %v344 = vpack.c.bf16 %v314, %v313
        %v345 = vpack.c.bf16 %v316, %v315
        %v346 = vpack.c.bf16 %v318, %v317
        %v347 = vpack.c.bf16 %v320, %v319
        %v348 = vpack.c.bf16 %v322, %v321
        %v349 = vpack.c.bf16 %v324, %v323
        %v350 = vpack.c.bf16 %v326, %v325
        %v351 = vpack.c.bf16 %v328, %v327
        %v352 = vld [vmem:[%s2] sm:$0x7]
        %s353 = scalar_lea.vmem %s2, 4
        %v354 = vld [vmem:[%s353] sm:$0x7]
        %vm355 = vsmask.f32 7424
        %v357 = vshrl.u32 %v334, 16
        %v359 = vshll.u32 %v334, 16
        %v361 = vrot.slane %v359, 1
        %v362 = vor.u32 %v357, %v361
        %v364 = vshll.u32 %v335, 16
        %v366 = vrot.slane %v364, 1
        %v367 = vsel %vm355, %v362, %v366
        %v368 = vshrl.u32 %v335, 16
        %v370 = vor.u32 %v368, %v366
        %v372 = vshll.u32 %v336, 16
        %v374 = vrot.slane %v372, 1
        %v375 = vsel %vm355, %v370, %v374
        %v376 = vshrl.u32 %v336, 16
        %v378 = vor.u32 %v376, %v374
        %v380 = vshll.u32 %v337, 16
        %v382 = vrot.slane %v380, 1
        %v383 = vsel %vm355, %v378, %v382
        %v384 = vshrl.u32 %v337, 16
        %v386 = vor.u32 %v384, %v382
        %v388 = vshll.u32 %v338, 16
        %v390 = vrot.slane %v388, 1
        %v391 = vsel %vm355, %v386, %v390
        %v392 = vshrl.u32 %v338, 16
        %v394 = vor.u32 %v392, %v390
        %v396 = vshll.u32 %v339, 16
        %v398 = vrot.slane %v396, 1
        %v399 = vsel %vm355, %v394, %v398
        %v400 = vshrl.u32 %v339, 16
        %v402 = vor.u32 %v400, %v398
        %v404 = vshll.u32 %v340, 16
        %v406 = vrot.slane %v404, 1
        %v407 = vsel %vm355, %v402, %v406
        %v408 = vshrl.u32 %v340, 16
        %v410 = vor.u32 %v408, %v406
        %v412 = vshll.u32 %v341, 16
        %v414 = vrot.slane %v412, 1
        %v415 = vsel %vm355, %v410, %v414
        %v416 = vshrl.u32 %v341, 16
        %v418 = vor.u32 %v416, %v414
        %v420 = vshll.u32 %v342, 16
        %v422 = vrot.slane %v420, 1
        %v423 = vsel %vm355, %v418, %v422
        %v424 = vshrl.u32 %v342, 16
        %v426 = vor.u32 %v424, %v422
        %v428 = vshll.u32 %v343, 16
        %v430 = vrot.slane %v428, 1
        %v431 = vsel %vm355, %v426, %v430
        %v432 = vshrl.u32 %v343, 16
        %v434 = vor.u32 %v432, %v430
        %v436 = vshll.u32 %v344, 16
        %v438 = vrot.slane %v436, 1
        %v439 = vsel %vm355, %v434, %v438
        %v440 = vshrl.u32 %v344, 16
        %v442 = vor.u32 %v440, %v438
        %v444 = vshll.u32 %v345, 16
        %v446 = vrot.slane %v444, 1
        %v447 = vsel %vm355, %v442, %v446
        %v448 = vshrl.u32 %v345, 16
        %v450 = vor.u32 %v448, %v446
        %v452 = vshll.u32 %v346, 16
        %v454 = vrot.slane %v452, 1
        %v455 = vsel %vm355, %v450, %v454
        %v456 = vshrl.u32 %v346, 16
        %v458 = vor.u32 %v456, %v454
        %v460 = vshll.u32 %v347, 16
        %v462 = vrot.slane %v460, 1
        %v463 = vsel %vm355, %v458, %v462
        %v464 = vshrl.u32 %v347, 16
        %v466 = vor.u32 %v464, %v462
        %v468 = vshll.u32 %v348, 16
        %v470 = vrot.slane %v468, 1
        %v471 = vsel %vm355, %v466, %v470
        %v472 = vshrl.u32 %v348, 16
        %v474 = vor.u32 %v472, %v470
        %v476 = vshll.u32 %v349, 16
        %v478 = vrot.slane %v476, 1
        %v479 = vsel %vm355, %v474, %v478
        %v480 = vshrl.u32 %v349, 16
        %v482 = vor.u32 %v480, %v478
        %v484 = vshll.u32 %v350, 16
        %v486 = vrot.slane %v484, 1
        %v487 = vsel %vm355, %v482, %v486
        %v488 = vshrl.u32 %v350, 16
        %v490 = vor.u32 %v488, %v486
        %v492 = vshll.u32 %v351, 16
        %v494 = vrot.slane %v492, 1
        %v495 = vsel %vm355, %v490, %v494
        %v496 = vshrl.u32 %v351, 16
        %v498 = vor.u32 %v496, %v494
        %vm499 = vcmask 48128
        %v501 = vsel %vm499, %v367, 0
        %v504 = vsel %vm499, %v375, 0
        %v507 = vsel %vm499, %v383, 0
        %v510 = vsel %vm499, %v391, 0
        %v513 = vsel %vm499, %v399, 0
        %v516 = vsel %vm499, %v407, 0
        %v519 = vsel %vm499, %v415, 0
        %v522 = vsel %vm499, %v423, 0
        %v525 = vsel %vm499, %v431, 0
        %v528 = vsel %vm499, %v439, 0
        %v531 = vsel %vm499, %v447, 0
        %v534 = vsel %vm499, %v455, 0
        %v537 = vsel %vm499, %v463, 0
        %v540 = vsel %vm499, %v471, 0
        %v543 = vsel %vm499, %v479, 0
        %v546 = vsel %vm499, %v487, 0
        %v549 = vsel %vm499, %v495, 0
        %v552 = vsel %vm499, %v498, 0
        %vm554 = vcmask 1042432
        %v556 = vsel %vm554, %v354, 0
        %558 = vmatpush.bf16.msra.mxu0 0
        %559 = vmatpush.bf16.msra.mxu0 0
        %560 = vmatpush.bf16.msra.mxu0 0
        %561 = vmatpush.bf16.msra.mxu0 0
        %562 = vmatpush.bf16.msra.mxu0 0
        %563 = vmatpush.bf16.msra.mxu0 0
        %564 = vmatpush.bf16.msra.mxu0 0
        %565 = vmatpush.bf16.msra.mxu0 %v556
        %566 = vmatmul.bf16.gmra.mxu0 %v501
        %v567 = vpop.f32.mrf.mxu0
        %v568 = vadd.f32 0.0, %v567
        %v569 = vpop.f32.mrf.mxu0
        %v570 = vadd.f32 0.0, %v569
        %571 = vmatmul.bf16.gmra.mxu0 %v504
        %v572 = vpop.f32.mrf.mxu0
        %v573 = vadd.f32 0.0, %v572
        %v574 = vpop.f32.mrf.mxu0
        %v575 = vadd.f32 0.0, %v574
        %576 = vmatmul.bf16.gmra.mxu0 %v507
        %v577 = vpop.f32.mrf.mxu0
        %v578 = vadd.f32 0.0, %v577
        %v579 = vpop.f32.mrf.mxu0
        %v580 = vadd.f32 0.0, %v579
        %581 = vmatmul.bf16.gmra.mxu0 %v510
        %v582 = vpop.f32.mrf.mxu0
        %v583 = vadd.f32 0.0, %v582
        %v584 = vpop.f32.mrf.mxu0
        %v585 = vadd.f32 0.0, %v584
        %586 = vmatmul.bf16.gmra.mxu0 %v513
        %v587 = vpop.f32.mrf.mxu0
        %v588 = vadd.f32 0.0, %v587
        %v589 = vpop.f32.mrf.mxu0
        %v590 = vadd.f32 0.0, %v589
        %591 = vmatmul.bf16.gmra.mxu0 %v516
        %v592 = vpop.f32.mrf.mxu0
        %v593 = vadd.f32 0.0, %v592
        %v594 = vpop.f32.mrf.mxu0
        %v595 = vadd.f32 0.0, %v594
        %596 = vmatmul.bf16.gmra.mxu0 %v519
        %v597 = vpop.f32.mrf.mxu0
        %v598 = vadd.f32 0.0, %v597
        %v599 = vpop.f32.mrf.mxu0
        %v600 = vadd.f32 0.0, %v599
        %601 = vmatmul.bf16.gmra.mxu0 %v522
        %v602 = vpop.f32.mrf.mxu0
        %v603 = vadd.f32 0.0, %v602
        %v604 = vpop.f32.mrf.mxu0
        %v605 = vadd.f32 0.0, %v604
        %606 = vmatmul.bf16.gmra.mxu0 %v525
        %v607 = vpop.f32.mrf.mxu0
        %v608 = vadd.f32 0.0, %v607
        %v609 = vpop.f32.mrf.mxu0
        %v610 = vadd.f32 0.0, %v609
        %611 = vmatmul.bf16.gmra.mxu0 %v528
        %v612 = vpop.f32.mrf.mxu0
        %v613 = vadd.f32 0.0, %v612
        %v614 = vpop.f32.mrf.mxu0
        %v615 = vadd.f32 0.0, %v614
        %616 = vmatmul.bf16.gmra.mxu0 %v531
        %v617 = vpop.f32.mrf.mxu0
        %v618 = vadd.f32 0.0, %v617
        %v619 = vpop.f32.mrf.mxu0
        %v620 = vadd.f32 0.0, %v619
        %621 = vmatmul.bf16.gmra.mxu0 %v534
        %v622 = vpop.f32.mrf.mxu0
        %v623 = vadd.f32 0.0, %v622
        %v624 = vpop.f32.mrf.mxu0
        %v625 = vadd.f32 0.0, %v624
        %626 = vmatmul.bf16.gmra.mxu0 %v537
        %v627 = vpop.f32.mrf.mxu0
        %v628 = vadd.f32 0.0, %v627
        %v629 = vpop.f32.mrf.mxu0
        %v630 = vadd.f32 0.0, %v629
        %631 = vmatmul.bf16.gmra.mxu0 %v540
        %v632 = vpop.f32.mrf.mxu0
        %v633 = vadd.f32 0.0, %v632
        %v634 = vpop.f32.mrf.mxu0
        %v635 = vadd.f32 0.0, %v634
        %636 = vmatmul.bf16.gmra.mxu0 %v543
        %v637 = vpop.f32.mrf.mxu0
        %v638 = vadd.f32 0.0, %v637
        %v639 = vpop.f32.mrf.mxu0
        %v640 = vadd.f32 0.0, %v639
        %641 = vmatmul.bf16.gmra.mxu0 %v546
        %v642 = vpop.f32.mrf.mxu0
        %v643 = vadd.f32 0.0, %v642
        %v644 = vpop.f32.mrf.mxu0
        %v645 = vadd.f32 0.0, %v644
        %646 = vmatmul.bf16.gmra.mxu0 %v549
        %v647 = vpop.f32.mrf.mxu0
        %v648 = vadd.f32 0.0, %v647
        %v649 = vpop.f32.mrf.mxu0
        %v650 = vadd.f32 0.0, %v649
        %651 = vmatmul.bf16.gmra.mxu0 %v552
        %v652 = vpop.f32.mrf.mxu0
        %v653 = vadd.f32 0.0, %v652
        %v654 = vpop.f32.mrf.mxu0
        %v655 = vadd.f32 0.0, %v654
        %656 = vdwg.mxu0
        %v657 = vsel %vm499, %v334, 0
        %v659 = vsel %vm499, %v335, 0
        %v661 = vsel %vm499, %v336, 0
        %v663 = vsel %vm499, %v337, 0
        %v665 = vsel %vm499, %v338, 0
        %v667 = vsel %vm499, %v339, 0
        %v669 = vsel %vm499, %v340, 0
        %v671 = vsel %vm499, %v341, 0
        %v673 = vsel %vm499, %v342, 0
        %v675 = vsel %vm499, %v343, 0
        %v677 = vsel %vm499, %v344, 0
        %v679 = vsel %vm499, %v345, 0
        %v681 = vsel %vm499, %v346, 0
        %v683 = vsel %vm499, %v347, 0
        %v685 = vsel %vm499, %v348, 0
        %v687 = vsel %vm499, %v349, 0
        %v689 = vsel %vm499, %v350, 0
        %v691 = vsel %vm499, %v351, 0
        %v694 = vsel %vm554, %v352, 0
        %696 = vmatpush.bf16.msra.mxu0 0
        %697 = vmatpush.bf16.msra.mxu0 0
        %698 = vmatpush.bf16.msra.mxu0 0
        %699 = vmatpush.bf16.msra.mxu0 0
        %700 = vmatpush.bf16.msra.mxu0 0
        %701 = vmatpush.bf16.msra.mxu0 0
        %702 = vmatpush.bf16.msra.mxu0 0
        %703 = vmatpush.bf16.msra.mxu0 %v694
        %704 = vmatmul.bf16.gmra.mxu0 %v657
        %v705 = vpop.f32.mrf.mxu0
        %v706 = vadd.f32 %v568, %v705
        %v707 = vpop.f32.mrf.mxu0
        %v708 = vadd.f32 %v570, %v707
        %709 = vmatmul.bf16.gmra.mxu0 %v659
        %v710 = vpop.f32.mrf.mxu0
        %v711 = vadd.f32 %v573, %v710
        %v712 = vpop.f32.mrf.mxu0
        %v713 = vadd.f32 %v575, %v712
        %714 = vmatmul.bf16.gmra.mxu0 %v661
        %v715 = vpop.f32.mrf.mxu0
        %v716 = vadd.f32 %v578, %v715
        %v717 = vpop.f32.mrf.mxu0
        %v718 = vadd.f32 %v580, %v717
        %719 = vmatmul.bf16.gmra.mxu0 %v663
        %v720 = vpop.f32.mrf.mxu0
        %v721 = vadd.f32 %v583, %v720
        %v722 = vpop.f32.mrf.mxu0
        %v723 = vadd.f32 %v585, %v722
        %724 = vmatmul.bf16.gmra.mxu0 %v665
        %v725 = vpop.f32.mrf.mxu0
        %v726 = vadd.f32 %v588, %v725
        %v727 = vpop.f32.mrf.mxu0
        %v728 = vadd.f32 %v590, %v727
        %729 = vmatmul.bf16.gmra.mxu0 %v667
        %v730 = vpop.f32.mrf.mxu0
        %v731 = vadd.f32 %v593, %v730
        %v732 = vpop.f32.mrf.mxu0
        %v733 = vadd.f32 %v595, %v732
        %734 = vmatmul.bf16.gmra.mxu0 %v669
        %v735 = vpop.f32.mrf.mxu0
        %v736 = vadd.f32 %v598, %v735
        %v737 = vpop.f32.mrf.mxu0
        %v738 = vadd.f32 %v600, %v737
        %739 = vmatmul.bf16.gmra.mxu0 %v671
        %v740 = vpop.f32.mrf.mxu0
        %v741 = vadd.f32 %v603, %v740
        %v742 = vpop.f32.mrf.mxu0
        %v743 = vadd.f32 %v605, %v742
        %744 = vmatmul.bf16.gmra.mxu0 %v673
        %v745 = vpop.f32.mrf.mxu0
        %v746 = vadd.f32 %v608, %v745
        %v747 = vpop.f32.mrf.mxu0
        %v748 = vadd.f32 %v610, %v747
        %749 = vmatmul.bf16.gmra.mxu0 %v675
        %v750 = vpop.f32.mrf.mxu0
        %v751 = vadd.f32 %v613, %v750
        %v752 = vpop.f32.mrf.mxu0
        %v753 = vadd.f32 %v615, %v752
        %754 = vmatmul.bf16.gmra.mxu0 %v677
        %v755 = vpop.f32.mrf.mxu0
        %v756 = vadd.f32 %v618, %v755
        %v757 = vpop.f32.mrf.mxu0
        %v758 = vadd.f32 %v620, %v757
        %759 = vmatmul.bf16.gmra.mxu0 %v679
        %v760 = vpop.f32.mrf.mxu0
        %v761 = vadd.f32 %v623, %v760
        %v762 = vpop.f32.mrf.mxu0
        %v763 = vadd.f32 %v625, %v762
        %764 = vmatmul.bf16.gmra.mxu0 %v681
        %v765 = vpop.f32.mrf.mxu0
        %v766 = vadd.f32 %v628, %v765
        %v767 = vpop.f32.mrf.mxu0
        %v768 = vadd.f32 %v630, %v767
        %769 = vmatmul.bf16.gmra.mxu0 %v683
        %v770 = vpop.f32.mrf.mxu0
        %v771 = vadd.f32 %v633, %v770
        %v772 = vpop.f32.mrf.mxu0
        %v773 = vadd.f32 %v635, %v772
        %774 = vmatmul.bf16.gmra.mxu0 %v685
        %v775 = vpop.f32.mrf.mxu0
        %v776 = vadd.f32 %v638, %v775
        %v777 = vpop.f32.mrf.mxu0
        %v778 = vadd.f32 %v640, %v777
        %779 = vmatmul.bf16.gmra.mxu0 %v687
        %v780 = vpop.f32.mrf.mxu0
        %v781 = vadd.f32 %v643, %v780
        %v782 = vpop.f32.mrf.mxu0
        %v783 = vadd.f32 %v645, %v782
        %784 = vmatmul.bf16.gmra.mxu0 %v689
        %v785 = vpop.f32.mrf.mxu0
        %v786 = vadd.f32 %v648, %v785
        %v787 = vpop.f32.mrf.mxu0
        %v788 = vadd.f32 %v650, %v787
        %789 = vmatmul.bf16.gmra.mxu0 %v691
        %v790 = vpop.f32.mrf.mxu0
        %v791 = vadd.f32 %v653, %v790
        %v792 = vpop.f32.mrf.mxu0
        %v793 = vadd.f32 %v655, %v792
        %794 = vdwg.mxu0
        %s795 = scalar_lea.vmem %s2, 8
        %v796 = vld [vmem:[%s795] sm:$0x7]
        %vm815 = vcmask 1046528
        %v816 = vrot.slane %v334, 1
        %v817 = vrot.slane %v335, 1
        %v818 = vsel %vm815, %v816, %v817
        %v819 = vrot.slane %v336, 1
        %v820 = vsel %vm815, %v817, %v819
        %v821 = vrot.slane %v337, 1
        %v822 = vsel %vm815, %v819, %v821
        %v823 = vrot.slane %v338, 1
        %v824 = vsel %vm815, %v821, %v823
        %v825 = vrot.slane %v339, 1
        %v826 = vsel %vm815, %v823, %v825
        %v827 = vrot.slane %v340, 1
        %v828 = vsel %vm815, %v825, %v827
        %v829 = vrot.slane %v341, 1
        %v830 = vsel %vm815, %v827, %v829
        %v831 = vrot.slane %v342, 1
        %v832 = vsel %vm815, %v829, %v831
        %v833 = vrot.slane %v343, 1
        %v834 = vsel %vm815, %v831, %v833
        %v835 = vrot.slane %v344, 1
        %v836 = vsel %vm815, %v833, %v835
        %v837 = vrot.slane %v345, 1
        %v838 = vsel %vm815, %v835, %v837
        %v839 = vrot.slane %v346, 1
        %v840 = vsel %vm815, %v837, %v839
        %v841 = vrot.slane %v347, 1
        %v842 = vsel %vm815, %v839, %v841
        %v843 = vrot.slane %v348, 1
        %v844 = vsel %vm815, %v841, %v843
        %v845 = vrot.slane %v349, 1
        %v846 = vsel %vm815, %v843, %v845
        %v847 = vrot.slane %v350, 1
        %v848 = vsel %vm815, %v845, %v847
        %v849 = vrot.slane %v351, 1
        %v850 = vsel %vm815, %v847, %v849
        %v852 = vsel %vm499, %v818, 0
        %v855 = vsel %vm499, %v820, 0
        %v858 = vsel %vm499, %v822, 0
        %v861 = vsel %vm499, %v824, 0
        %v864 = vsel %vm499, %v826, 0
        %v867 = vsel %vm499, %v828, 0
        %v870 = vsel %vm499, %v830, 0
        %v873 = vsel %vm499, %v832, 0
        %v876 = vsel %vm499, %v834, 0
        %v879 = vsel %vm499, %v836, 0
        %v882 = vsel %vm499, %v838, 0
        %v885 = vsel %vm499, %v840, 0
        %v888 = vsel %vm499, %v842, 0
        %v891 = vsel %vm499, %v844, 0
        %v894 = vsel %vm499, %v846, 0
        %v897 = vsel %vm499, %v848, 0
        %v900 = vsel %vm499, %v850, 0
        %v903 = vsel %vm499, %v849, 0
        %v906 = vsel %vm554, %v796, 0
        %908 = vmatpush.bf16.msra.mxu0 0
        %909 = vmatpush.bf16.msra.mxu0 0
        %910 = vmatpush.bf16.msra.mxu0 0
        %911 = vmatpush.bf16.msra.mxu0 0
        %912 = vmatpush.bf16.msra.mxu0 0
        %913 = vmatpush.bf16.msra.mxu0 0
        %914 = vmatpush.bf16.msra.mxu0 0
        %915 = vmatpush.bf16.msra.mxu0 %v906
        %916 = vmatmul.bf16.gmra.mxu0 %v852
        %v917 = vpop.f32.mrf.mxu0
        %v918 = vadd.f32 0.0, %v917
        %v919 = vpop.f32.mrf.mxu0
        %v920 = vadd.f32 0.0, %v919
        %921 = vmatmul.bf16.gmra.mxu0 %v855
        %v922 = vpop.f32.mrf.mxu0
        %v923 = vadd.f32 0.0, %v922
        %v924 = vpop.f32.mrf.mxu0
        %v925 = vadd.f32 0.0, %v924
        %926 = vmatmul.bf16.gmra.mxu0 %v858
        %v927 = vpop.f32.mrf.mxu0
        %v928 = vadd.f32 0.0, %v927
        %v929 = vpop.f32.mrf.mxu0
        %v930 = vadd.f32 0.0, %v929
        %931 = vmatmul.bf16.gmra.mxu0 %v861
        %v932 = vpop.f32.mrf.mxu0
        %v933 = vadd.f32 0.0, %v932
        %v934 = vpop.f32.mrf.mxu0
        %v935 = vadd.f32 0.0, %v934
        %936 = vmatmul.bf16.gmra.mxu0 %v864
        %v937 = vpop.f32.mrf.mxu0
        %v938 = vadd.f32 0.0, %v937
        %v939 = vpop.f32.mrf.mxu0
        %v940 = vadd.f32 0.0, %v939
        %941 = vmatmul.bf16.gmra.mxu0 %v867
        %v942 = vpop.f32.mrf.mxu0
        %v943 = vadd.f32 0.0, %v942
        %v944 = vpop.f32.mrf.mxu0
        %v945 = vadd.f32 0.0, %v944
        %946 = vmatmul.bf16.gmra.mxu0 %v870
        %v947 = vpop.f32.mrf.mxu0
        %v948 = vadd.f32 0.0, %v947
        %v949 = vpop.f32.mrf.mxu0
        %v950 = vadd.f32 0.0, %v949
        %951 = vmatmul.bf16.gmra.mxu0 %v873
        %v952 = vpop.f32.mrf.mxu0
        %v953 = vadd.f32 0.0, %v952
        %v954 = vpop.f32.mrf.mxu0
        %v955 = vadd.f32 0.0, %v954
        %956 = vmatmul.bf16.gmra.mxu0 %v876
        %v957 = vpop.f32.mrf.mxu0
        %v958 = vadd.f32 0.0, %v957
        %v959 = vpop.f32.mrf.mxu0
        %v960 = vadd.f32 0.0, %v959
        %961 = vmatmul.bf16.gmra.mxu0 %v879
        %v962 = vpop.f32.mrf.mxu0
        %v963 = vadd.f32 0.0, %v962
        %v964 = vpop.f32.mrf.mxu0
        %v965 = vadd.f32 0.0, %v964
        %966 = vmatmul.bf16.gmra.mxu0 %v882
        %v967 = vpop.f32.mrf.mxu0
        %v968 = vadd.f32 0.0, %v967
        %v969 = vpop.f32.mrf.mxu0
        %v970 = vadd.f32 0.0, %v969
        %971 = vmatmul.bf16.gmra.mxu0 %v885
        %v972 = vpop.f32.mrf.mxu0
        %v973 = vadd.f32 0.0, %v972
        %v974 = vpop.f32.mrf.mxu0
        %v975 = vadd.f32 0.0, %v974
        %976 = vmatmul.bf16.gmra.mxu0 %v888
        %v977 = vpop.f32.mrf.mxu0
        %v978 = vadd.f32 0.0, %v977
        %v979 = vpop.f32.mrf.mxu0
        %v980 = vadd.f32 0.0, %v979
        %981 = vmatmul.bf16.gmra.mxu0 %v891
        %v982 = vpop.f32.mrf.mxu0
        %v983 = vadd.f32 0.0, %v982
        %v984 = vpop.f32.mrf.mxu0
        %v985 = vadd.f32 0.0, %v984
        %986 = vmatmul.bf16.gmra.mxu0 %v894
        %v987 = vpop.f32.mrf.mxu0
        %v988 = vadd.f32 0.0, %v987
        %v989 = vpop.f32.mrf.mxu0
        %v990 = vadd.f32 0.0, %v989
        %991 = vmatmul.bf16.gmra.mxu0 %v897
        %v992 = vpop.f32.mrf.mxu0
        %v993 = vadd.f32 0.0, %v992
        %v994 = vpop.f32.mrf.mxu0
        %v995 = vadd.f32 0.0, %v994
        %996 = vmatmul.bf16.gmra.mxu0 %v900
        %v997 = vpop.f32.mrf.mxu0
        %v998 = vadd.f32 0.0, %v997
        %v999 = vpop.f32.mrf.mxu0
        %v1000 = vadd.f32 0.0, %v999
        %1001 = vmatmul.bf16.gmra.mxu0 %v903
        %v1002 = vpop.f32.mrf.mxu0
        %v1003 = vadd.f32 0.0, %v1002
        %v1004 = vpop.f32.mrf.mxu0
        %v1005 = vadd.f32 0.0, %v1004
        %1006 = vdwg.mxu0
        %v1007 = vadd.f32 %v706, %v918
        %v1008 = vadd.f32 %v708, %v920
        %v1009 = vadd.f32 %v711, %v923
        %v1010 = vadd.f32 %v713, %v925
        %v1011 = vadd.f32 %v716, %v928
        %v1012 = vadd.f32 %v718, %v930
        %v1013 = vadd.f32 %v721, %v933
        %v1014 = vadd.f32 %v723, %v935
        %v1015 = vadd.f32 %v726, %v938
        %v1016 = vadd.f32 %v728, %v940
        %v1017 = vadd.f32 %v731, %v943
        %v1018 = vadd.f32 %v733, %v945
        %v1019 = vadd.f32 %v736, %v948
        %v1020 = vadd.f32 %v738, %v950
        %v1021 = vadd.f32 %v741, %v953
        %v1022 = vadd.f32 %v743, %v955
        %v1023 = vadd.f32 %v746, %v958
        %v1024 = vadd.f32 %v748, %v960
        %v1025 = vadd.f32 %v751, %v963
        %v1026 = vadd.f32 %v753, %v965
        %v1027 = vadd.f32 %v756, %v968
        %v1028 = vadd.f32 %v758, %v970
        %v1029 = vadd.f32 %v761, %v973
        %v1030 = vadd.f32 %v763, %v975
        %v1031 = vadd.f32 %v766, %v978
        %v1032 = vadd.f32 %v768, %v980
        %v1033 = vadd.f32 %v771, %v983
        %v1034 = vadd.f32 %v773, %v985
        %v1035 = vadd.f32 %v776, %v988
        %v1036 = vadd.f32 %v778, %v990
        %v1037 = vadd.f32 %v781, %v993
        %v1038 = vadd.f32 %v783, %v995
        %v1039 = vadd.f32 %v786, %v998
        %v1040 = vadd.f32 %v788, %v1000
        %v1041 = vadd.f32 %v791, %v1003
        %v1042 = vadd.f32 %v793, %v1005
        %v1043 = vpack.c.bf16 %v330, %v329
        %s1044 = scalar_lea.vmem %s2, 12
        %v1045 = vld [vmem:[%s1044] sm:$0x7]
        %v1047 = vrot.slane %v1043, 1
        %v1048 = vsel %vm815, %v849, %v1047
        %v1050 = vsel %vm499, %v1048, 0
        %v1053 = vsel %vm499, %v1047, 0
        %v1056 = vsel %vm554, %v1045, 0
        %1058 = vmatpush.bf16.msra.mxu0 0
        %1059 = vmatpush.bf16.msra.mxu0 0
        %1060 = vmatpush.bf16.msra.mxu0 0
        %1061 = vmatpush.bf16.msra.mxu0 0
        %1062 = vmatpush.bf16.msra.mxu0 0
        %1063 = vmatpush.bf16.msra.mxu0 0
        %1064 = vmatpush.bf16.msra.mxu0 0
        %1065 = vmatpush.bf16.msra.mxu0 %v1056
        %1066 = vmatmul.bf16.gmra.mxu0 %v855
        %v1067 = vpop.f32.mrf.mxu0
        %v1068 = vadd.f32 0.0, %v1067
        %v1069 = vpop.f32.mrf.mxu0
        %v1070 = vadd.f32 0.0, %v1069
        %1071 = vmatmul.bf16.gmra.mxu0 %v858
        %v1072 = vpop.f32.mrf.mxu0
        %v1073 = vadd.f32 0.0, %v1072
        %v1074 = vpop.f32.mrf.mxu0
        %v1075 = vadd.f32 0.0, %v1074
        %1076 = vmatmul.bf16.gmra.mxu0 %v861
        %v1077 = vpop.f32.mrf.mxu0
        %v1078 = vadd.f32 0.0, %v1077
        %v1079 = vpop.f32.mrf.mxu0
        %v1080 = vadd.f32 0.0, %v1079
        %1081 = vmatmul.bf16.gmra.mxu0 %v864
        %v1082 = vpop.f32.mrf.mxu0
        %v1083 = vadd.f32 0.0, %v1082
        %v1084 = vpop.f32.mrf.mxu0
        %v1085 = vadd.f32 0.0, %v1084
        %1086 = vmatmul.bf16.gmra.mxu0 %v867
        %v1087 = vpop.f32.mrf.mxu0
        %v1088 = vadd.f32 0.0, %v1087
        %v1089 = vpop.f32.mrf.mxu0
        %v1090 = vadd.f32 0.0, %v1089
        %1091 = vmatmul.bf16.gmra.mxu0 %v870
        %v1092 = vpop.f32.mrf.mxu0
        %v1093 = vadd.f32 0.0, %v1092
        %v1094 = vpop.f32.mrf.mxu0
        %v1095 = vadd.f32 0.0, %v1094
        %1096 = vmatmul.bf16.gmra.mxu0 %v873
        %v1097 = vpop.f32.mrf.mxu0
        %v1098 = vadd.f32 0.0, %v1097
        %v1099 = vpop.f32.mrf.mxu0
        %v1100 = vadd.f32 0.0, %v1099
        %1101 = vmatmul.bf16.gmra.mxu0 %v876
        %v1102 = vpop.f32.mrf.mxu0
        %v1103 = vadd.f32 0.0, %v1102
        %v1104 = vpop.f32.mrf.mxu0
        %v1105 = vadd.f32 0.0, %v1104
        %1106 = vmatmul.bf16.gmra.mxu0 %v879
        %v1107 = vpop.f32.mrf.mxu0
        %v1108 = vadd.f32 0.0, %v1107
        %v1109 = vpop.f32.mrf.mxu0
        %v1110 = vadd.f32 0.0, %v1109
        %1111 = vmatmul.bf16.gmra.mxu0 %v882
        %v1112 = vpop.f32.mrf.mxu0
        %v1113 = vadd.f32 0.0, %v1112
        %v1114 = vpop.f32.mrf.mxu0
        %v1115 = vadd.f32 0.0, %v1114
        %1116 = vmatmul.bf16.gmra.mxu0 %v885
        %v1117 = vpop.f32.mrf.mxu0
        %v1118 = vadd.f32 0.0, %v1117
        %v1119 = vpop.f32.mrf.mxu0
        %v1120 = vadd.f32 0.0, %v1119
        %1121 = vmatmul.bf16.gmra.mxu0 %v888
        %v1122 = vpop.f32.mrf.mxu0
        %v1123 = vadd.f32 0.0, %v1122
        %v1124 = vpop.f32.mrf.mxu0
        %v1125 = vadd.f32 0.0, %v1124
        %1126 = vmatmul.bf16.gmra.mxu0 %v891
        %v1127 = vpop.f32.mrf.mxu0
        %v1128 = vadd.f32 0.0, %v1127
        %v1129 = vpop.f32.mrf.mxu0
        %v1130 = vadd.f32 0.0, %v1129
        %1131 = vmatmul.bf16.gmra.mxu0 %v894
        %v1132 = vpop.f32.mrf.mxu0
        %v1133 = vadd.f32 0.0, %v1132
        %v1134 = vpop.f32.mrf.mxu0
        %v1135 = vadd.f32 0.0, %v1134
        %1136 = vmatmul.bf16.gmra.mxu0 %v897
        %v1137 = vpop.f32.mrf.mxu0
        %v1138 = vadd.f32 0.0, %v1137
        %v1139 = vpop.f32.mrf.mxu0
        %v1140 = vadd.f32 0.0, %v1139
        %1141 = vmatmul.bf16.gmra.mxu0 %v900
        %v1142 = vpop.f32.mrf.mxu0
        %v1143 = vadd.f32 0.0, %v1142
        %v1144 = vpop.f32.mrf.mxu0
        %v1145 = vadd.f32 0.0, %v1144
        %1146 = vmatmul.bf16.gmra.mxu0 %v1050
        %v1147 = vpop.f32.mrf.mxu0
        %v1148 = vadd.f32 0.0, %v1147
        %v1149 = vpop.f32.mrf.mxu0
        %v1150 = vadd.f32 0.0, %v1149
        %1151 = vmatmul.bf16.gmra.mxu0 %v1053
        %v1152 = vpop.f32.mrf.mxu0
        %v1153 = vadd.f32 0.0, %v1152
        %v1154 = vpop.f32.mrf.mxu0
        %v1155 = vadd.f32 0.0, %v1154
        %1156 = vdwg.mxu0
        %v1157 = vadd.f32 %v1007, %v1068
        %v1158 = vadd.f32 %v1008, %v1070
        %v1159 = vadd.f32 %v1009, %v1073
        %v1160 = vadd.f32 %v1010, %v1075
        %v1161 = vadd.f32 %v1011, %v1078
        %v1162 = vadd.f32 %v1012, %v1080
        %v1163 = vadd.f32 %v1013, %v1083
        %v1164 = vadd.f32 %v1014, %v1085
        %v1165 = vadd.f32 %v1015, %v1088
        %v1166 = vadd.f32 %v1016, %v1090
        %v1167 = vadd.f32 %v1017, %v1093
        %v1168 = vadd.f32 %v1018, %v1095
        %v1169 = vadd.f32 %v1019, %v1098
        %v1170 = vadd.f32 %v1020, %v1100
        %v1171 = vadd.f32 %v1021, %v1103
        %v1172 = vadd.f32 %v1022, %v1105
        %v1173 = vadd.f32 %v1023, %v1108
        %v1174 = vadd.f32 %v1024, %v1110
        %v1175 = vadd.f32 %v1025, %v1113
        %v1176 = vadd.f32 %v1026, %v1115
        %v1177 = vadd.f32 %v1027, %v1118
        %v1178 = vadd.f32 %v1028, %v1120
        %v1179 = vadd.f32 %v1029, %v1123
        %v1180 = vadd.f32 %v1030, %v1125
        %v1181 = vadd.f32 %v1031, %v1128
        %v1182 = vadd.f32 %v1032, %v1130
        %v1183 = vadd.f32 %v1033, %v1133
        %v1184 = vadd.f32 %v1034, %v1135
        %v1185 = vadd.f32 %v1035, %v1138
        %v1186 = vadd.f32 %v1036, %v1140
        %v1187 = vadd.f32 %v1037, %v1143
        %v1188 = vadd.f32 %v1038, %v1145
        %v1189 = vadd.f32 %v1039, %v1148
        %v1190 = vadd.f32 %v1040, %v1150
        %v1191 = vadd.f32 %v1041, %v1153
        %v1192 = vadd.f32 %v1042, %v1155
        %v1193 = vpack.c.bf16 %v331, %v331
        %s1194 = scalar_lea.vmem %s2, 16
        %v1195 = vld [vmem:[%s1194] sm:$0x7]
        %vm1196 = vsmask.f32 6400
        %v1197 = vrot.slane %v368, 1
        %v1198 = vrot.slane %v364, 2
        %v1199 = vor.u32 %v1197, %v1198
        %v1200 = vrot.slane %v376, 1
        %v1201 = vrot.slane %v372, 2
        %v1202 = vor.u32 %v1200, %v1201
        %v1203 = vsel %vm1196, %v1199, %v1202
        %v1204 = vrot.slane %v384, 1
        %v1205 = vrot.slane %v380, 2
        %v1206 = vor.u32 %v1204, %v1205
        %v1207 = vsel %vm1196, %v1202, %v1206
        %v1208 = vrot.slane %v392, 1
        %v1209 = vrot.slane %v388, 2
        %v1210 = vor.u32 %v1208, %v1209
        %v1211 = vsel %vm1196, %v1206, %v1210
        %v1212 = vrot.slane %v400, 1
        %v1213 = vrot.slane %v396, 2
        %v1214 = vor.u32 %v1212, %v1213
        %v1215 = vsel %vm1196, %v1210, %v1214
        %v1216 = vrot.slane %v408, 1
        %v1217 = vrot.slane %v404, 2
        %v1218 = vor.u32 %v1216, %v1217
        %v1219 = vsel %vm1196, %v1214, %v1218
        %v1220 = vrot.slane %v416, 1
        %v1221 = vrot.slane %v412, 2
        %v1222 = vor.u32 %v1220, %v1221
        %v1223 = vsel %vm1196, %v1218, %v1222
        %v1224 = vrot.slane %v424, 1
        %v1225 = vrot.slane %v420, 2
        %v1226 = vor.u32 %v1224, %v1225
        %v1227 = vsel %vm1196, %v1222, %v1226
        %v1228 = vrot.slane %v432, 1
        %v1229 = vrot.slane %v428, 2
        %v1230 = vor.u32 %v1228, %v1229
        %v1231 = vsel %vm1196, %v1226, %v1230
        %v1232 = vrot.slane %v440, 1
        %v1233 = vrot.slane %v436, 2
        %v1234 = vor.u32 %v1232, %v1233
        %v1235 = vsel %vm1196, %v1230, %v1234
        %v1236 = vrot.slane %v448, 1
        %v1237 = vrot.slane %v444, 2
        %v1238 = vor.u32 %v1236, %v1237
        %v1239 = vsel %vm1196, %v1234, %v1238
        %v1240 = vrot.slane %v456, 1
        %v1241 = vrot.slane %v452, 2
        %v1242 = vor.u32 %v1240, %v1241
        %v1243 = vsel %vm1196, %v1238, %v1242
        %v1244 = vrot.slane %v464, 1
        %v1245 = vrot.slane %v460, 2
        %v1246 = vor.u32 %v1244, %v1245
        %v1247 = vsel %vm1196, %v1242, %v1246
        %v1248 = vrot.slane %v472, 1
        %v1249 = vrot.slane %v468, 2
        %v1250 = vor.u32 %v1248, %v1249
        %v1251 = vsel %vm1196, %v1246, %v1250
        %v1252 = vrot.slane %v480, 1
        %v1253 = vrot.slane %v476, 2
        %v1254 = vor.u32 %v1252, %v1253
        %v1255 = vsel %vm1196, %v1250, %v1254
        %v1256 = vrot.slane %v488, 1
        %v1257 = vrot.slane %v484, 2
        %v1258 = vor.u32 %v1256, %v1257
        %v1259 = vsel %vm1196, %v1254, %v1258
        %v1260 = vrot.slane %v496, 1
        %v1261 = vrot.slane %v492, 2
        %v1262 = vor.u32 %v1260, %v1261
        %v1263 = vsel %vm1196, %v1258, %v1262
        %v1265 = vshrl.u32 %v1043, 16
        %v1267 = vrot.slane %v1265, 1
        %v1268 = vshll.u32 %v1043, 16
        %v1270 = vrot.slane %v1268, 2
        %v1271 = vor.u32 %v1267, %v1270
        %v1272 = vsel %vm1196, %v1262, %v1271
        %v1274 = vshll.u32 %v1193, 16
        %v1276 = vrot.slane %v1274, 2
        %v1277 = vsel %vm1196, %v1271, %v1276
        %v1279 = vsel %vm499, %v1203, 0
        %v1282 = vsel %vm499, %v1207, 0
        %v1285 = vsel %vm499, %v1211, 0
        %v1288 = vsel %vm499, %v1215, 0
        %v1291 = vsel %vm499, %v1219, 0
        %v1294 = vsel %vm499, %v1223, 0
        %v1297 = vsel %vm499, %v1227, 0
        %v1300 = vsel %vm499, %v1231, 0
        %v1303 = vsel %vm499, %v1235, 0
        %v1306 = vsel %vm499, %v1239, 0
        %v1309 = vsel %vm499, %v1243, 0
        %v1312 = vsel %vm499, %v1247, 0
        %v1315 = vsel %vm499, %v1251, 0
        %v1318 = vsel %vm499, %v1255, 0
        %v1321 = vsel %vm499, %v1259, 0
        %v1324 = vsel %vm499, %v1263, 0
        %v1327 = vsel %vm499, %v1272, 0
        %v1330 = vsel %vm499, %v1277, 0
        %v1333 = vsel %vm554, %v1195, 0
        %1335 = vmatpush.bf16.msra.mxu0 0
        %1336 = vmatpush.bf16.msra.mxu0 0
        %1337 = vmatpush.bf16.msra.mxu0 0
        %1338 = vmatpush.bf16.msra.mxu0 0
        %1339 = vmatpush.bf16.msra.mxu0 0
        %1340 = vmatpush.bf16.msra.mxu0 0
        %1341 = vmatpush.bf16.msra.mxu0 0
        %1342 = vmatpush.bf16.msra.mxu0 %v1333
        %1343 = vmatmul.bf16.gmra.mxu0 %v1279
        %v1344 = vpop.f32.mrf.mxu0
        %v1345 = vadd.f32 0.0, %v1344
        %v1346 = vpop.f32.mrf.mxu0
        %v1347 = vadd.f32 0.0, %v1346
        %1348 = vmatmul.bf16.gmra.mxu0 %v1282
        %v1349 = vpop.f32.mrf.mxu0
        %v1350 = vadd.f32 0.0, %v1349
        %v1351 = vpop.f32.mrf.mxu0
        %v1352 = vadd.f32 0.0, %v1351
        %1353 = vmatmul.bf16.gmra.mxu0 %v1285
        %v1354 = vpop.f32.mrf.mxu0
        %v1355 = vadd.f32 0.0, %v1354
        %v1356 = vpop.f32.mrf.mxu0
        %v1357 = vadd.f32 0.0, %v1356
        %1358 = vmatmul.bf16.gmra.mxu0 %v1288
        %v1359 = vpop.f32.mrf.mxu0
        %v1360 = vadd.f32 0.0, %v1359
        %v1361 = vpop.f32.mrf.mxu0
        %v1362 = vadd.f32 0.0, %v1361
        %1363 = vmatmul.bf16.gmra.mxu0 %v1291
        %v1364 = vpop.f32.mrf.mxu0
        %v1365 = vadd.f32 0.0, %v1364
        %v1366 = vpop.f32.mrf.mxu0
        %v1367 = vadd.f32 0.0, %v1366
        %1368 = vmatmul.bf16.gmra.mxu0 %v1294
        %v1369 = vpop.f32.mrf.mxu0
        %v1370 = vadd.f32 0.0, %v1369
        %v1371 = vpop.f32.mrf.mxu0
        %v1372 = vadd.f32 0.0, %v1371
        %1373 = vmatmul.bf16.gmra.mxu0 %v1297
        %v1374 = vpop.f32.mrf.mxu0
        %v1375 = vadd.f32 0.0, %v1374
        %v1376 = vpop.f32.mrf.mxu0
        %v1377 = vadd.f32 0.0, %v1376
        %1378 = vmatmul.bf16.gmra.mxu0 %v1300
        %v1379 = vpop.f32.mrf.mxu0
        %v1380 = vadd.f32 0.0, %v1379
        %v1381 = vpop.f32.mrf.mxu0
        %v1382 = vadd.f32 0.0, %v1381
        %1383 = vmatmul.bf16.gmra.mxu0 %v1303
        %v1384 = vpop.f32.mrf.mxu0
        %v1385 = vadd.f32 0.0, %v1384
        %v1386 = vpop.f32.mrf.mxu0
        %v1387 = vadd.f32 0.0, %v1386
        %1388 = vmatmul.bf16.gmra.mxu0 %v1306
        %v1389 = vpop.f32.mrf.mxu0
        %v1390 = vadd.f32 0.0, %v1389
        %v1391 = vpop.f32.mrf.mxu0
        %v1392 = vadd.f32 0.0, %v1391
        %1393 = vmatmul.bf16.gmra.mxu0 %v1309
        %v1394 = vpop.f32.mrf.mxu0
        %v1395 = vadd.f32 0.0, %v1394
        %v1396 = vpop.f32.mrf.mxu0
        %v1397 = vadd.f32 0.0, %v1396
        %1398 = vmatmul.bf16.gmra.mxu0 %v1312
        %v1399 = vpop.f32.mrf.mxu0
        %v1400 = vadd.f32 0.0, %v1399
        %v1401 = vpop.f32.mrf.mxu0
        %v1402 = vadd.f32 0.0, %v1401
        %1403 = vmatmul.bf16.gmra.mxu0 %v1315
        %v1404 = vpop.f32.mrf.mxu0
        %v1405 = vadd.f32 0.0, %v1404
        %v1406 = vpop.f32.mrf.mxu0
        %v1407 = vadd.f32 0.0, %v1406
        %1408 = vmatmul.bf16.gmra.mxu0 %v1318
        %v1409 = vpop.f32.mrf.mxu0
        %v1410 = vadd.f32 0.0, %v1409
        %v1411 = vpop.f32.mrf.mxu0
        %v1412 = vadd.f32 0.0, %v1411
        %1413 = vmatmul.bf16.gmra.mxu0 %v1321
        %v1414 = vpop.f32.mrf.mxu0
        %v1415 = vadd.f32 0.0, %v1414
        %v1416 = vpop.f32.mrf.mxu0
        %v1417 = vadd.f32 0.0, %v1416
        %1418 = vmatmul.bf16.gmra.mxu0 %v1324
        %v1419 = vpop.f32.mrf.mxu0
        %v1420 = vadd.f32 0.0, %v1419
        %v1421 = vpop.f32.mrf.mxu0
        %v1422 = vadd.f32 0.0, %v1421
        %1423 = vmatmul.bf16.gmra.mxu0 %v1327
        %v1424 = vpop.f32.mrf.mxu0
        %v1425 = vadd.f32 0.0, %v1424
        %v1426 = vpop.f32.mrf.mxu0
        %v1427 = vadd.f32 0.0, %v1426
        %1428 = vmatmul.bf16.gmra.mxu0 %v1330
        %v1429 = vpop.f32.mrf.mxu0
        %v1430 = vadd.f32 0.0, %v1429
        %v1431 = vpop.f32.mrf.mxu0
        %v1432 = vadd.f32 0.0, %v1431
        %1433 = vdwg.mxu0
        %v1434 = vadd.f32 %v1157, %v1345
        %v1435 = vadd.f32 %v1158, %v1347
        %v1436 = vadd.f32 %v1159, %v1350
        %v1437 = vadd.f32 %v1160, %v1352
        %v1438 = vadd.f32 %v1161, %v1355
        %v1439 = vadd.f32 %v1162, %v1357
        %v1440 = vadd.f32 %v1163, %v1360
        %v1441 = vadd.f32 %v1164, %v1362
        %v1442 = vadd.f32 %v1165, %v1365
        %v1443 = vadd.f32 %v1166, %v1367
        %v1444 = vadd.f32 %v1167, %v1370
        %v1445 = vadd.f32 %v1168, %v1372
        %v1446 = vadd.f32 %v1169, %v1375
        %v1447 = vadd.f32 %v1170, %v1377
        %v1448 = vadd.f32 %v1171, %v1380
        %v1449 = vadd.f32 %v1172, %v1382
        %v1450 = vadd.f32 %v1173, %v1385
        %v1451 = vadd.f32 %v1174, %v1387
        %v1452 = vadd.f32 %v1175, %v1390
        %v1453 = vadd.f32 %v1176, %v1392
        %v1454 = vadd.f32 %v1177, %v1395
        %v1455 = vadd.f32 %v1178, %v1397
        %v1456 = vadd.f32 %v1179, %v1400
        %v1457 = vadd.f32 %v1180, %v1402
        %v1458 = vadd.f32 %v1181, %v1405
        %v1459 = vadd.f32 %v1182, %v1407
        %v1460 = vadd.f32 %v1183, %v1410
        %v1461 = vadd.f32 %v1184, %v1412
        %v1462 = vadd.f32 %v1185, %v1415
        %v1463 = vadd.f32 %v1186, %v1417
        %v1464 = vadd.f32 %v1187, %v1420
        %v1465 = vadd.f32 %v1188, %v1422
        %v1466 = vadd.f32 %v1189, %v1425
        %v1467 = vadd.f32 %v1190, %v1427
        %v1468 = vadd.f32 %v1191, %v1430
        %v1469 = vadd.f32 %v1192, %v1432
        %s1470 = scalar_lea.vmem %s2, 20
        %v1471 = vld [vmem:[%s1470] sm:$0x7]
        %vm1473 = vcmask 1045504
        %v1474 = vrot.slane %v335, 2
        %v1475 = vrot.slane %v336, 2
        %v1476 = vsel %vm1473, %v1474, %v1475
        %v1477 = vrot.slane %v337, 2
        %v1478 = vsel %vm1473, %v1475, %v1477
        %v1479 = vrot.slane %v338, 2
        %v1480 = vsel %vm1473, %v1477, %v1479
        %v1481 = vrot.slane %v339, 2
        %v1482 = vsel %vm1473, %v1479, %v1481
        %v1483 = vrot.slane %v340, 2
        %v1484 = vsel %vm1473, %v1481, %v1483
        %v1485 = vrot.slane %v341, 2
        %v1486 = vsel %vm1473, %v1483, %v1485
        %v1487 = vrot.slane %v342, 2
        %v1488 = vsel %vm1473, %v1485, %v1487
        %v1489 = vrot.slane %v343, 2
        %v1490 = vsel %vm1473, %v1487, %v1489
        %v1491 = vrot.slane %v344, 2
        %v1492 = vsel %vm1473, %v1489, %v1491
        %v1493 = vrot.slane %v345, 2
        %v1494 = vsel %vm1473, %v1491, %v1493
        %v1495 = vrot.slane %v346, 2
        %v1496 = vsel %vm1473, %v1493, %v1495
        %v1497 = vrot.slane %v347, 2
        %v1498 = vsel %vm1473, %v1495, %v1497
        %v1499 = vrot.slane %v348, 2
        %v1500 = vsel %vm1473, %v1497, %v1499
        %v1501 = vrot.slane %v349, 2
        %v1502 = vsel %vm1473, %v1499, %v1501
        %v1503 = vrot.slane %v350, 2
        %v1504 = vsel %vm1473, %v1501, %v1503
        %v1505 = vrot.slane %v351, 2
        %v1506 = vsel %vm1473, %v1503, %v1505
        %v1507 = vrot.slane %v1043, 2
        %v1508 = vsel %vm1473, %v1505, %v1507
        %v1509 = vrot.slane %v1193, 2
        %v1510 = vsel %vm1473, %v1507, %v1509
        %v1512 = vsel %vm499, %v1476, 0
        %v1515 = vsel %vm499, %v1478, 0
        %v1518 = vsel %vm499, %v1480, 0
        %v1521 = vsel %vm499, %v1482, 0
        %v1524 = vsel %vm499, %v1484, 0
        %v1527 = vsel %vm499, %v1486, 0
        %v1530 = vsel %vm499, %v1488, 0
        %v1533 = vsel %vm499, %v1490, 0
        %v1536 = vsel %vm499, %v1492, 0
        %v1539 = vsel %vm499, %v1494, 0
        %v1542 = vsel %vm499, %v1496, 0
        %v1545 = vsel %vm499, %v1498, 0
        %v1548 = vsel %vm499, %v1500, 0
        %v1551 = vsel %vm499, %v1502, 0
        %v1554 = vsel %vm499, %v1504, 0
        %v1557 = vsel %vm499, %v1506, 0
        %v1560 = vsel %vm499, %v1508, 0
        %v1563 = vsel %vm499, %v1510, 0
        %v1566 = vsel %vm554, %v1471, 0
        %1568 = vmatpush.bf16.msra.mxu0 0
        %1569 = vmatpush.bf16.msra.mxu0 0
        %1570 = vmatpush.bf16.msra.mxu0 0
        %1571 = vmatpush.bf16.msra.mxu0 0
        %1572 = vmatpush.bf16.msra.mxu0 0
        %1573 = vmatpush.bf16.msra.mxu0 0
        %1574 = vmatpush.bf16.msra.mxu0 0
        %1575 = vmatpush.bf16.msra.mxu0 %v1566
        %1576 = vmatmul.bf16.gmra.mxu0 %v1512
        %v1577 = vpop.f32.mrf.mxu0
        %v1578 = vadd.f32 0.0, %v1577
        %v1579 = vpop.f32.mrf.mxu0
        %v1580 = vadd.f32 0.0, %v1579
        %1581 = vmatmul.bf16.gmra.mxu0 %v1515
        %v1582 = vpop.f32.mrf.mxu0
        %v1583 = vadd.f32 0.0, %v1582
        %v1584 = vpop.f32.mrf.mxu0
        %v1585 = vadd.f32 0.0, %v1584
        %1586 = vmatmul.bf16.gmra.mxu0 %v1518
        %v1587 = vpop.f32.mrf.mxu0
        %v1588 = vadd.f32 0.0, %v1587
        %v1589 = vpop.f32.mrf.mxu0
        %v1590 = vadd.f32 0.0, %v1589
        %1591 = vmatmul.bf16.gmra.mxu0 %v1521
        %v1592 = vpop.f32.mrf.mxu0
        %v1593 = vadd.f32 0.0, %v1592
        %v1594 = vpop.f32.mrf.mxu0
        %v1595 = vadd.f32 0.0, %v1594
        %1596 = vmatmul.bf16.gmra.mxu0 %v1524
        %v1597 = vpop.f32.mrf.mxu0
        %v1598 = vadd.f32 0.0, %v1597
        %v1599 = vpop.f32.mrf.mxu0
        %v1600 = vadd.f32 0.0, %v1599
        %1601 = vmatmul.bf16.gmra.mxu0 %v1527
        %v1602 = vpop.f32.mrf.mxu0
        %v1603 = vadd.f32 0.0, %v1602
        %v1604 = vpop.f32.mrf.mxu0
        %v1605 = vadd.f32 0.0, %v1604
        %1606 = vmatmul.bf16.gmra.mxu0 %v1530
        %v1607 = vpop.f32.mrf.mxu0
        %v1608 = vadd.f32 0.0, %v1607
        %v1609 = vpop.f32.mrf.mxu0
        %v1610 = vadd.f32 0.0, %v1609
        %1611 = vmatmul.bf16.gmra.mxu0 %v1533
        %v1612 = vpop.f32.mrf.mxu0
        %v1613 = vadd.f32 0.0, %v1612
        %v1614 = vpop.f32.mrf.mxu0
        %v1615 = vadd.f32 0.0, %v1614
        %1616 = vmatmul.bf16.gmra.mxu0 %v1536
        %v1617 = vpop.f32.mrf.mxu0
        %v1618 = vadd.f32 0.0, %v1617
        %v1619 = vpop.f32.mrf.mxu0
        %v1620 = vadd.f32 0.0, %v1619
        %1621 = vmatmul.bf16.gmra.mxu0 %v1539
        %v1622 = vpop.f32.mrf.mxu0
        %v1623 = vadd.f32 0.0, %v1622
        %v1624 = vpop.f32.mrf.mxu0
        %v1625 = vadd.f32 0.0, %v1624
        %1626 = vmatmul.bf16.gmra.mxu0 %v1542
        %v1627 = vpop.f32.mrf.mxu0
        %v1628 = vadd.f32 0.0, %v1627
        %v1629 = vpop.f32.mrf.mxu0
        %v1630 = vadd.f32 0.0, %v1629
        %1631 = vmatmul.bf16.gmra.mxu0 %v1545
        %v1632 = vpop.f32.mrf.mxu0
        %v1633 = vadd.f32 0.0, %v1632
        %v1634 = vpop.f32.mrf.mxu0
        %v1635 = vadd.f32 0.0, %v1634
        %1636 = vmatmul.bf16.gmra.mxu0 %v1548
        %v1637 = vpop.f32.mrf.mxu0
        %v1638 = vadd.f32 0.0, %v1637
        %v1639 = vpop.f32.mrf.mxu0
        %v1640 = vadd.f32 0.0, %v1639
        %1641 = vmatmul.bf16.gmra.mxu0 %v1551
        %v1642 = vpop.f32.mrf.mxu0
        %v1643 = vadd.f32 0.0, %v1642
        %v1644 = vpop.f32.mrf.mxu0
        %v1645 = vadd.f32 0.0, %v1644
        %1646 = vmatmul.bf16.gmra.mxu0 %v1554
        %v1647 = vpop.f32.mrf.mxu0
        %v1648 = vadd.f32 0.0, %v1647
        %v1649 = vpop.f32.mrf.mxu0
        %v1650 = vadd.f32 0.0, %v1649
        %1651 = vmatmul.bf16.gmra.mxu0 %v1557
        %v1652 = vpop.f32.mrf.mxu0
        %v1653 = vadd.f32 0.0, %v1652
        %v1654 = vpop.f32.mrf.mxu0
        %v1655 = vadd.f32 0.0, %v1654
        %1656 = vmatmul.bf16.gmra.mxu0 %v1560
        %v1657 = vpop.f32.mrf.mxu0
        %v1658 = vadd.f32 0.0, %v1657
        %v1659 = vpop.f32.mrf.mxu0
        %v1660 = vadd.f32 0.0, %v1659
        %1661 = vmatmul.bf16.gmra.mxu0 %v1563
        %v1662 = vpop.f32.mrf.mxu0
        %v1663 = vadd.f32 0.0, %v1662
        %v1664 = vpop.f32.mrf.mxu0
        %v1665 = vadd.f32 0.0, %v1664
        %1666 = vdwg.mxu0
        %v1667 = vadd.f32 %v1434, %v1578
        %v1668 = vadd.f32 %v1435, %v1580
        %v1669 = vadd.f32 %v1436, %v1583
        %v1670 = vadd.f32 %v1437, %v1585
        %v1671 = vadd.f32 %v1438, %v1588
        %v1672 = vadd.f32 %v1439, %v1590
        %v1673 = vadd.f32 %v1440, %v1593
        %v1674 = vadd.f32 %v1441, %v1595
        %v1675 = vadd.f32 %v1442, %v1598
        %v1676 = vadd.f32 %v1443, %v1600
        %v1677 = vadd.f32 %v1444, %v1603
        %v1678 = vadd.f32 %v1445, %v1605
        %v1679 = vadd.f32 %v1446, %v1608
        %v1680 = vadd.f32 %v1447, %v1610
        %v1681 = vadd.f32 %v1448, %v1613
        %v1682 = vadd.f32 %v1449, %v1615
        %v1683 = vadd.f32 %v1450, %v1618
        %v1684 = vadd.f32 %v1451, %v1620
        %v1685 = vadd.f32 %v1452, %v1623
        %v1686 = vadd.f32 %v1453, %v1625
        %v1687 = vadd.f32 %v1454, %v1628
        %v1688 = vadd.f32 %v1455, %v1630
        %v1689 = vadd.f32 %v1456, %v1633
        %v1690 = vadd.f32 %v1457, %v1635
        %v1691 = vadd.f32 %v1458, %v1638
        %v1692 = vadd.f32 %v1459, %v1640
        %v1693 = vadd.f32 %v1460, %v1643
        %v1694 = vadd.f32 %v1461, %v1645
        %v1695 = vadd.f32 %v1462, %v1648
        %v1696 = vadd.f32 %v1463, %v1650
        %v1697 = vadd.f32 %v1464, %v1653
        %v1698 = vadd.f32 %v1465, %v1655
        %v1699 = vadd.f32 %v1466, %v1658
        %v1700 = vadd.f32 %v1467, %v1660
        %v1701 = vadd.f32 %v1468, %v1663
        %v1702 = vadd.f32 %v1469, %v1665
        %v1703 = vpack.c.bf16 %v332, %v331
        %v1704 = vpack.c.bf16 %v333, %v333
        %s1705 = scalar_lea.vmem %s2, 24
        %v1706 = vld [vmem:[%s1705] sm:$0x7]
        %v1709 = vrot.slane %v1703, 2
        %v1710 = vsel %vm1473, %v1507, %v1709
        %v1711 = vrot.slane %v1704, 2
        %v1712 = vsel %vm1473, %v1709, %v1711
        %v1714 = vsel %vm499, %v1710, 0
        %v1717 = vsel %vm499, %v1712, 0
        %v1720 = vsel %vm554, %v1706, 0
        %1722 = vmatpush.bf16.msra.mxu0 0
        %1723 = vmatpush.bf16.msra.mxu0 0
        %1724 = vmatpush.bf16.msra.mxu0 0
        %1725 = vmatpush.bf16.msra.mxu0 0
        %1726 = vmatpush.bf16.msra.mxu0 0
        %1727 = vmatpush.bf16.msra.mxu0 0
        %1728 = vmatpush.bf16.msra.mxu0 0
        %1729 = vmatpush.bf16.msra.mxu0 %v1720
        %1730 = vmatmul.bf16.gmra.mxu0 %v1515
        %v1731 = vpop.f32.mrf.mxu0
        %v1732 = vadd.f32 0.0, %v1731
        %v1733 = vpop.f32.mrf.mxu0
        %v1734 = vadd.f32 0.0, %v1733
        %1735 = vmatmul.bf16.gmra.mxu0 %v1518
        %v1736 = vpop.f32.mrf.mxu0
        %v1737 = vadd.f32 0.0, %v1736
        %v1738 = vpop.f32.mrf.mxu0
        %v1739 = vadd.f32 0.0, %v1738
        %1740 = vmatmul.bf16.gmra.mxu0 %v1521
        %v1741 = vpop.f32.mrf.mxu0
        %v1742 = vadd.f32 0.0, %v1741
        %v1743 = vpop.f32.mrf.mxu0
        %v1744 = vadd.f32 0.0, %v1743
        %1745 = vmatmul.bf16.gmra.mxu0 %v1524
        %v1746 = vpop.f32.mrf.mxu0
        %v1747 = vadd.f32 0.0, %v1746
        %v1748 = vpop.f32.mrf.mxu0
        %v1749 = vadd.f32 0.0, %v1748
        %1750 = vmatmul.bf16.gmra.mxu0 %v1527
        %v1751 = vpop.f32.mrf.mxu0
        %v1752 = vadd.f32 0.0, %v1751
        %v1753 = vpop.f32.mrf.mxu0
        %v1754 = vadd.f32 0.0, %v1753
        %1755 = vmatmul.bf16.gmra.mxu0 %v1530
        %v1756 = vpop.f32.mrf.mxu0
        %v1757 = vadd.f32 0.0, %v1756
        %v1758 = vpop.f32.mrf.mxu0
        %v1759 = vadd.f32 0.0, %v1758
        %1760 = vmatmul.bf16.gmra.mxu0 %v1533
        %v1761 = vpop.f32.mrf.mxu0
        %v1762 = vadd.f32 0.0, %v1761
        %v1763 = vpop.f32.mrf.mxu0
        %v1764 = vadd.f32 0.0, %v1763
        %1765 = vmatmul.bf16.gmra.mxu0 %v1536
        %v1766 = vpop.f32.mrf.mxu0
        %v1767 = vadd.f32 0.0, %v1766
        %v1768 = vpop.f32.mrf.mxu0
        %v1769 = vadd.f32 0.0, %v1768
        %1770 = vmatmul.bf16.gmra.mxu0 %v1539
        %v1771 = vpop.f32.mrf.mxu0
        %v1772 = vadd.f32 0.0, %v1771
        %v1773 = vpop.f32.mrf.mxu0
        %v1774 = vadd.f32 0.0, %v1773
        %1775 = vmatmul.bf16.gmra.mxu0 %v1542
        %v1776 = vpop.f32.mrf.mxu0
        %v1777 = vadd.f32 0.0, %v1776
        %v1778 = vpop.f32.mrf.mxu0
        %v1779 = vadd.f32 0.0, %v1778
        %1780 = vmatmul.bf16.gmra.mxu0 %v1545
        %v1781 = vpop.f32.mrf.mxu0
        %v1782 = vadd.f32 0.0, %v1781
        %v1783 = vpop.f32.mrf.mxu0
        %v1784 = vadd.f32 0.0, %v1783
        %1785 = vmatmul.bf16.gmra.mxu0 %v1548
        %v1786 = vpop.f32.mrf.mxu0
        %v1787 = vadd.f32 0.0, %v1786
        %v1788 = vpop.f32.mrf.mxu0
        %v1789 = vadd.f32 0.0, %v1788
        %1790 = vmatmul.bf16.gmra.mxu0 %v1551
        %v1791 = vpop.f32.mrf.mxu0
        %v1792 = vadd.f32 0.0, %v1791
        %v1793 = vpop.f32.mrf.mxu0
        %v1794 = vadd.f32 0.0, %v1793
        %1795 = vmatmul.bf16.gmra.mxu0 %v1554
        %v1796 = vpop.f32.mrf.mxu0
        %v1797 = vadd.f32 0.0, %v1796
        %v1798 = vpop.f32.mrf.mxu0
        %v1799 = vadd.f32 0.0, %v1798
        %1800 = vmatmul.bf16.gmra.mxu0 %v1557
        %v1801 = vpop.f32.mrf.mxu0
        %v1802 = vadd.f32 0.0, %v1801
        %v1803 = vpop.f32.mrf.mxu0
        %v1804 = vadd.f32 0.0, %v1803
        %1805 = vmatmul.bf16.gmra.mxu0 %v1560
        %v1806 = vpop.f32.mrf.mxu0
        %v1807 = vadd.f32 0.0, %v1806
        %v1808 = vpop.f32.mrf.mxu0
        %v1809 = vadd.f32 0.0, %v1808
        %1810 = vmatmul.bf16.gmra.mxu0 %v1714
        %v1811 = vpop.f32.mrf.mxu0
        %v1812 = vadd.f32 0.0, %v1811
        %v1813 = vpop.f32.mrf.mxu0
        %v1814 = vadd.f32 0.0, %v1813
        %1815 = vmatmul.bf16.gmra.mxu0 %v1717
        %v1816 = vpop.f32.mrf.mxu0
        %v1817 = vadd.f32 0.0, %v1816
        %v1818 = vpop.f32.mrf.mxu0
        %v1819 = vadd.f32 0.0, %v1818
        %1820 = vdwg.mxu0
        %v1821 = vadd.f32 %v1667, %v1732
        %v1822 = vadd.f32 %v1668, %v1734
        %v1823 = vadd.f32 %v1669, %v1737
        %v1824 = vadd.f32 %v1670, %v1739
        %v1825 = vadd.f32 %v1671, %v1742
        %v1826 = vadd.f32 %v1672, %v1744
        %v1827 = vadd.f32 %v1673, %v1747
        %v1828 = vadd.f32 %v1674, %v1749
        %v1829 = vadd.f32 %v1675, %v1752
        %v1830 = vadd.f32 %v1676, %v1754
        %v1831 = vadd.f32 %v1677, %v1757
        %v1832 = vadd.f32 %v1678, %v1759
        %v1833 = vadd.f32 %v1679, %v1762
        %v1834 = vadd.f32 %v1680, %v1764
        %v1835 = vadd.f32 %v1681, %v1767
        %v1836 = vadd.f32 %v1682, %v1769
        %v1837 = vadd.f32 %v1683, %v1772
        %v1838 = vadd.f32 %v1684, %v1774
        %v1839 = vadd.f32 %v1685, %v1777
        %v1840 = vadd.f32 %v1686, %v1779
        %v1841 = vadd.f32 %v1687, %v1782
        %v1842 = vadd.f32 %v1688, %v1784
        %v1843 = vadd.f32 %v1689, %v1787
        %v1844 = vadd.f32 %v1690, %v1789
        %v1845 = vadd.f32 %v1691, %v1792
        %v1846 = vadd.f32 %v1692, %v1794
        %v1847 = vadd.f32 %v1693, %v1797
        %v1848 = vadd.f32 %v1694, %v1799
        %v1849 = vadd.f32 %v1695, %v1802
        %v1850 = vadd.f32 %v1696, %v1804
        %v1851 = vadd.f32 %v1697, %v1807
        %v1852 = vadd.f32 %v1698, %v1809
        %v1853 = vadd.f32 %v1699, %v1812
        %v1854 = vadd.f32 %v1700, %v1814
        %v1855 = vadd.f32 %v1701, %v1817
        %v1856 = vadd.f32 %v1702, %v1819
        %s1857 = scalar_lea.vmem %s2, 28
        %v1858 = vld [vmem:[%s1857] sm:$0x7]
        %vm1859 = vsmask.f32 5376
        %v1860 = vrot.slane %v376, 2
        %v1861 = vrot.slane %v372, 3
        %v1862 = vor.u32 %v1860, %v1861
        %v1863 = vrot.slane %v384, 2
        %v1864 = vrot.slane %v380, 3
        %v1865 = vor.u32 %v1863, %v1864
        %v1866 = vsel %vm1859, %v1862, %v1865
        %v1867 = vrot.slane %v392, 2
        %v1868 = vrot.slane %v388, 3
        %v1869 = vor.u32 %v1867, %v1868
        %v1870 = vsel %vm1859, %v1865, %v1869
        %v1871 = vrot.slane %v400, 2
        %v1872 = vrot.slane %v396, 3
        %v1873 = vor.u32 %v1871, %v1872
        %v1874 = vsel %vm1859, %v1869, %v1873
        %v1875 = vrot.slane %v408, 2
        %v1876 = vrot.slane %v404, 3
        %v1877 = vor.u32 %v1875, %v1876
        %v1878 = vsel %vm1859, %v1873, %v1877
        %v1879 = vrot.slane %v416, 2
        %v1880 = vrot.slane %v412, 3
        %v1881 = vor.u32 %v1879, %v1880
        %v1882 = vsel %vm1859, %v1877, %v1881
        %v1883 = vrot.slane %v424, 2
        %v1884 = vrot.slane %v420, 3
        %v1885 = vor.u32 %v1883, %v1884
        %v1886 = vsel %vm1859, %v1881, %v1885
        %v1887 = vrot.slane %v432, 2
        %v1888 = vrot.slane %v428, 3
        %v1889 = vor.u32 %v1887, %v1888
        %v1890 = vsel %vm1859, %v1885, %v1889
        %v1891 = vrot.slane %v440, 2
        %v1892 = vrot.slane %v436, 3
        %v1893 = vor.u32 %v1891, %v1892
        %v1894 = vsel %vm1859, %v1889, %v1893
        %v1895 = vrot.slane %v448, 2
        %v1896 = vrot.slane %v444, 3
        %v1897 = vor.u32 %v1895, %v1896
        %v1898 = vsel %vm1859, %v1893, %v1897
        %v1899 = vrot.slane %v456, 2
        %v1900 = vrot.slane %v452, 3
        %v1901 = vor.u32 %v1899, %v1900
        %v1902 = vsel %vm1859, %v1897, %v1901
        %v1903 = vrot.slane %v464, 2
        %v1904 = vrot.slane %v460, 3
        %v1905 = vor.u32 %v1903, %v1904
        %v1906 = vsel %vm1859, %v1901, %v1905
        %v1907 = vrot.slane %v472, 2
        %v1908 = vrot.slane %v468, 3
        %v1909 = vor.u32 %v1907, %v1908
        %v1910 = vsel %vm1859, %v1905, %v1909
        %v1911 = vrot.slane %v480, 2
        %v1912 = vrot.slane %v476, 3
        %v1913 = vor.u32 %v1911, %v1912
        %v1914 = vsel %vm1859, %v1909, %v1913
        %v1915 = vrot.slane %v488, 2
        %v1916 = vrot.slane %v484, 3
        %v1917 = vor.u32 %v1915, %v1916
        %v1918 = vsel %vm1859, %v1913, %v1917
        %v1919 = vrot.slane %v496, 2
        %v1920 = vrot.slane %v492, 3
        %v1921 = vor.u32 %v1919, %v1920
        %v1922 = vsel %vm1859, %v1917, %v1921
        %v1923 = vrot.slane %v1265, 2
        %v1924 = vrot.slane %v1268, 3
        %v1925 = vor.u32 %v1923, %v1924
        %v1926 = vsel %vm1859, %v1921, %v1925
        %v1928 = vshrl.u32 %v1703, 16
        %v1930 = vrot.slane %v1928, 2
        %v1931 = vshll.u32 %v1703, 16
        %v1933 = vrot.slane %v1931, 3
        %v1934 = vor.u32 %v1930, %v1933
        %v1935 = vsel %vm1859, %v1925, %v1934
        %v1937 = vshrl.u32 %v1704, 16
        %v1939 = vrot.slane %v1937, 2
        %v1940 = vshll.u32 %v1704, 16
        %v1942 = vrot.slane %v1940, 3
        %v1943 = vor.u32 %v1939, %v1942
        %v1944 = vsel %vm1859, %v1934, %v1943
        %v1946 = vsel %vm499, %v1866, 0
        %v1949 = vsel %vm499, %v1870, 0
        %v1952 = vsel %vm499, %v1874, 0
        %v1955 = vsel %vm499, %v1878, 0
        %v1958 = vsel %vm499, %v1882, 0
        %v1961 = vsel %vm499, %v1886, 0
        %v1964 = vsel %vm499, %v1890, 0
        %v1967 = vsel %vm499, %v1894, 0
        %v1970 = vsel %vm499, %v1898, 0
        %v1973 = vsel %vm499, %v1902, 0
        %v1976 = vsel %vm499, %v1906, 0
        %v1979 = vsel %vm499, %v1910, 0
        %v1982 = vsel %vm499, %v1914, 0
        %v1985 = vsel %vm499, %v1918, 0
        %v1988 = vsel %vm499, %v1922, 0
        %v1991 = vsel %vm499, %v1926, 0
        %v1994 = vsel %vm499, %v1935, 0
        %v1997 = vsel %vm499, %v1944, 0
        %v2000 = vsel %vm554, %v1858, 0
        %2002 = vmatpush.bf16.msra.mxu0 0
        %2003 = vmatpush.bf16.msra.mxu0 0
        %2004 = vmatpush.bf16.msra.mxu0 0
        %2005 = vmatpush.bf16.msra.mxu0 0
        %2006 = vmatpush.bf16.msra.mxu0 0
        %2007 = vmatpush.bf16.msra.mxu0 0
        %2008 = vmatpush.bf16.msra.mxu0 0
        %2009 = vmatpush.bf16.msra.mxu0 %v2000
        %2010 = vmatmul.bf16.gmra.mxu0 %v1946
        %v2011 = vpop.f32.mrf.mxu0
        %v2012 = vadd.f32 0.0, %v2011
        %v2013 = vpop.f32.mrf.mxu0
        %v2014 = vadd.f32 0.0, %v2013
        %2015 = vmatmul.bf16.gmra.mxu0 %v1949
        %v2016 = vpop.f32.mrf.mxu0
        %v2017 = vadd.f32 0.0, %v2016
        %v2018 = vpop.f32.mrf.mxu0
        %v2019 = vadd.f32 0.0, %v2018
        %2020 = vmatmul.bf16.gmra.mxu0 %v1952
        %v2021 = vpop.f32.mrf.mxu0
        %v2022 = vadd.f32 0.0, %v2021
        %v2023 = vpop.f32.mrf.mxu0
        %v2024 = vadd.f32 0.0, %v2023
        %2025 = vmatmul.bf16.gmra.mxu0 %v1955
        %v2026 = vpop.f32.mrf.mxu0
        %v2027 = vadd.f32 0.0, %v2026
        %v2028 = vpop.f32.mrf.mxu0
        %v2029 = vadd.f32 0.0, %v2028
        %2030 = vmatmul.bf16.gmra.mxu0 %v1958
        %v2031 = vpop.f32.mrf.mxu0
        %v2032 = vadd.f32 0.0, %v2031
        %v2033 = vpop.f32.mrf.mxu0
        %v2034 = vadd.f32 0.0, %v2033
        %2035 = vmatmul.bf16.gmra.mxu0 %v1961
        %v2036 = vpop.f32.mrf.mxu0
        %v2037 = vadd.f32 0.0, %v2036
        %v2038 = vpop.f32.mrf.mxu0
        %v2039 = vadd.f32 0.0, %v2038
        %2040 = vmatmul.bf16.gmra.mxu0 %v1964
        %v2041 = vpop.f32.mrf.mxu0
        %v2042 = vadd.f32 0.0, %v2041
        %v2043 = vpop.f32.mrf.mxu0
        %v2044 = vadd.f32 0.0, %v2043
        %2045 = vmatmul.bf16.gmra.mxu0 %v1967
        %v2046 = vpop.f32.mrf.mxu0
        %v2047 = vadd.f32 0.0, %v2046
        %v2048 = vpop.f32.mrf.mxu0
        %v2049 = vadd.f32 0.0, %v2048
        %2050 = vmatmul.bf16.gmra.mxu0 %v1970
        %v2051 = vpop.f32.mrf.mxu0
        %v2052 = vadd.f32 0.0, %v2051
        %v2053 = vpop.f32.mrf.mxu0
        %v2054 = vadd.f32 0.0, %v2053
        %2055 = vmatmul.bf16.gmra.mxu0 %v1973
        %v2056 = vpop.f32.mrf.mxu0
        %v2057 = vadd.f32 0.0, %v2056
        %v2058 = vpop.f32.mrf.mxu0
        %v2059 = vadd.f32 0.0, %v2058
        %2060 = vmatmul.bf16.gmra.mxu0 %v1976
        %v2061 = vpop.f32.mrf.mxu0
        %v2062 = vadd.f32 0.0, %v2061
        %v2063 = vpop.f32.mrf.mxu0
        %v2064 = vadd.f32 0.0, %v2063
        %2065 = vmatmul.bf16.gmra.mxu0 %v1979
        %v2066 = vpop.f32.mrf.mxu0
        %v2067 = vadd.f32 0.0, %v2066
        %v2068 = vpop.f32.mrf.mxu0
        %v2069 = vadd.f32 0.0, %v2068
        %2070 = vmatmul.bf16.gmra.mxu0 %v1982
        %v2071 = vpop.f32.mrf.mxu0
        %v2072 = vadd.f32 0.0, %v2071
        %v2073 = vpop.f32.mrf.mxu0
        %v2074 = vadd.f32 0.0, %v2073
        %2075 = vmatmul.bf16.gmra.mxu0 %v1985
        %v2076 = vpop.f32.mrf.mxu0
        %v2077 = vadd.f32 0.0, %v2076
        %v2078 = vpop.f32.mrf.mxu0
        %v2079 = vadd.f32 0.0, %v2078
        %2080 = vmatmul.bf16.gmra.mxu0 %v1988
        %v2081 = vpop.f32.mrf.mxu0
        %v2082 = vadd.f32 0.0, %v2081
        %v2083 = vpop.f32.mrf.mxu0
        %v2084 = vadd.f32 0.0, %v2083
        %2085 = vmatmul.bf16.gmra.mxu0 %v1991
        %v2086 = vpop.f32.mrf.mxu0
        %v2087 = vadd.f32 0.0, %v2086
        %v2088 = vpop.f32.mrf.mxu0
        %v2089 = vadd.f32 0.0, %v2088
        %2090 = vmatmul.bf16.gmra.mxu0 %v1994
        %v2091 = vpop.f32.mrf.mxu0
        %v2092 = vadd.f32 0.0, %v2091
        %v2093 = vpop.f32.mrf.mxu0
        %v2094 = vadd.f32 0.0, %v2093
        %2095 = vmatmul.bf16.gmra.mxu0 %v1997
        %v2096 = vpop.f32.mrf.mxu0
        %v2097 = vadd.f32 0.0, %v2096
        %v2098 = vpop.f32.mrf.mxu0
        %v2099 = vadd.f32 0.0, %v2098
        %2100 = vdwg.mxu0
        %v2101 = vadd.f32 %v1821, %v2012
        %v2102 = vadd.f32 %v1822, %v2014
        %v2103 = vadd.f32 %v1823, %v2017
        %v2104 = vadd.f32 %v1824, %v2019
        %v2105 = vadd.f32 %v1825, %v2022
        %v2106 = vadd.f32 %v1826, %v2024
        %v2107 = vadd.f32 %v1827, %v2027
        %v2108 = vadd.f32 %v1828, %v2029
        %v2109 = vadd.f32 %v1829, %v2032
        %v2110 = vadd.f32 %v1830, %v2034
        %v2111 = vadd.f32 %v1831, %v2037
        %v2112 = vadd.f32 %v1832, %v2039
        %v2113 = vadd.f32 %v1833, %v2042
        %v2114 = vadd.f32 %v1834, %v2044
        %v2115 = vadd.f32 %v1835, %v2047
        %v2116 = vadd.f32 %v1836, %v2049
        %v2117 = vadd.f32 %v1837, %v2052
        %v2118 = vadd.f32 %v1838, %v2054
        %v2119 = vadd.f32 %v1839, %v2057
        %v2120 = vadd.f32 %v1840, %v2059
        %v2121 = vadd.f32 %v1841, %v2062
        %v2122 = vadd.f32 %v1842, %v2064
        %v2123 = vadd.f32 %v1843, %v2067
        %v2124 = vadd.f32 %v1844, %v2069
        %v2125 = vadd.f32 %v1845, %v2072
        %v2126 = vadd.f32 %v1846, %v2074
        %v2127 = vadd.f32 %v1847, %v2077
        %v2128 = vadd.f32 %v1848, %v2079
        %v2129 = vadd.f32 %v1849, %v2082
        %v2130 = vadd.f32 %v1850, %v2084
        %v2131 = vadd.f32 %v1851, %v2087
        %v2132 = vadd.f32 %v1852, %v2089
        %v2133 = vadd.f32 %v1853, %v2092
        %v2134 = vadd.f32 %v1854, %v2094
        %v2135 = vadd.f32 %v1855, %v2097
        %v2136 = vadd.f32 %v1856, %v2099
        %s2137 = scalar_lea.vmem %s2, 32
        %v2138 = vld [vmem:[%s2137] sm:$0x7]
        %vm2139 = vcmask 1044480
        %v2140 = vrot.slane %v336, 3
        %v2141 = vrot.slane %v337, 3
        %v2142 = vsel %vm2139, %v2140, %v2141
        %v2143 = vrot.slane %v338, 3
        %v2144 = vsel %vm2139, %v2141, %v2143
        %v2145 = vrot.slane %v339, 3
        %v2146 = vsel %vm2139, %v2143, %v2145
        %v2147 = vrot.slane %v340, 3
        %v2148 = vsel %vm2139, %v2145, %v2147
        %v2149 = vrot.slane %v341, 3
        %v2150 = vsel %vm2139, %v2147, %v2149
        %v2151 = vrot.slane %v342, 3
        %v2152 = vsel %vm2139, %v2149, %v2151
        %v2153 = vrot.slane %v343, 3
        %v2154 = vsel %vm2139, %v2151, %v2153
        %v2155 = vrot.slane %v344, 3
        %v2156 = vsel %vm2139, %v2153, %v2155
        %v2157 = vrot.slane %v345, 3
        %v2158 = vsel %vm2139, %v2155, %v2157
        %v2159 = vrot.slane %v346, 3
        %v2160 = vsel %vm2139, %v2157, %v2159
        %v2161 = vrot.slane %v347, 3
        %v2162 = vsel %vm2139, %v2159, %v2161
        %v2163 = vrot.slane %v348, 3
        %v2164 = vsel %vm2139, %v2161, %v2163
        %v2165 = vrot.slane %v349, 3
        %v2166 = vsel %vm2139, %v2163, %v2165
        %v2167 = vrot.slane %v350, 3
        %v2168 = vsel %vm2139, %v2165, %v2167
        %v2169 = vrot.slane %v351, 3
        %v2170 = vsel %vm2139, %v2167, %v2169
        %v2171 = vrot.slane %v1043, 3
        %v2172 = vsel %vm2139, %v2169, %v2171
        %v2173 = vrot.slane %v1703, 3
        %v2174 = vsel %vm2139, %v2171, %v2173
        %v2175 = vrot.slane %v1704, 3
        %v2176 = vsel %vm2139, %v2173, %v2175
        %v2178 = vsel %vm499, %v2142, 0
        %v2181 = vsel %vm499, %v2144, 0
        %v2184 = vsel %vm499, %v2146, 0
        %v2187 = vsel %vm499, %v2148, 0
        %v2190 = vsel %vm499, %v2150, 0
        %v2193 = vsel %vm499, %v2152, 0
        %v2196 = vsel %vm499, %v2154, 0
        %v2199 = vsel %vm499, %v2156, 0
        %v2202 = vsel %vm499, %v2158, 0
        %v2205 = vsel %vm499, %v2160, 0
        %v2208 = vsel %vm499, %v2162, 0
        %v2211 = vsel %vm499, %v2164, 0
        %v2214 = vsel %vm499, %v2166, 0
        %v2217 = vsel %vm499, %v2168, 0
        %v2220 = vsel %vm499, %v2170, 0
        %v2223 = vsel %vm499, %v2172, 0
        %v2226 = vsel %vm499, %v2174, 0
        %v2229 = vsel %vm499, %v2176, 0
        %v2232 = vsel %vm554, %v2138, 0
        %2234 = vmatpush.bf16.msra.mxu0 0
        %2235 = vmatpush.bf16.msra.mxu0 0
        %2236 = vmatpush.bf16.msra.mxu0 0
        %2237 = vmatpush.bf16.msra.mxu0 0
        %2238 = vmatpush.bf16.msra.mxu0 0
        %2239 = vmatpush.bf16.msra.mxu0 0
        %2240 = vmatpush.bf16.msra.mxu0 0
        %2241 = vmatpush.bf16.msra.mxu0 %v2232
        %2242 = vmatmul.bf16.gmra.mxu0 %v2178
        %v2243 = vpop.f32.mrf.mxu0
        %v2244 = vadd.f32 0.0, %v2243
        %v2245 = vpop.f32.mrf.mxu0
        %v2246 = vadd.f32 0.0, %v2245
        %2247 = vmatmul.bf16.gmra.mxu0 %v2181
        %v2248 = vpop.f32.mrf.mxu0
        %v2249 = vadd.f32 0.0, %v2248
        %v2250 = vpop.f32.mrf.mxu0
        %v2251 = vadd.f32 0.0, %v2250
        %2252 = vmatmul.bf16.gmra.mxu0 %v2184
        %v2253 = vpop.f32.mrf.mxu0
        %v2254 = vadd.f32 0.0, %v2253
        %v2255 = vpop.f32.mrf.mxu0
        %v2256 = vadd.f32 0.0, %v2255
        %2257 = vmatmul.bf16.gmra.mxu0 %v2187
        %v2258 = vpop.f32.mrf.mxu0
        %v2259 = vadd.f32 0.0, %v2258
        %v2260 = vpop.f32.mrf.mxu0
        %v2261 = vadd.f32 0.0, %v2260
        %2262 = vmatmul.bf16.gmra.mxu0 %v2190
        %v2263 = vpop.f32.mrf.mxu0
        %v2264 = vadd.f32 0.0, %v2263
        %v2265 = vpop.f32.mrf.mxu0
        %v2266 = vadd.f32 0.0, %v2265
        %2267 = vmatmul.bf16.gmra.mxu0 %v2193
        %v2268 = vpop.f32.mrf.mxu0
        %v2269 = vadd.f32 0.0, %v2268
        %v2270 = vpop.f32.mrf.mxu0
        %v2271 = vadd.f32 0.0, %v2270
        %2272 = vmatmul.bf16.gmra.mxu0 %v2196
        %v2273 = vpop.f32.mrf.mxu0
        %v2274 = vadd.f32 0.0, %v2273
        %v2275 = vpop.f32.mrf.mxu0
        %v2276 = vadd.f32 0.0, %v2275
        %2277 = vmatmul.bf16.gmra.mxu0 %v2199
        %v2278 = vpop.f32.mrf.mxu0
        %v2279 = vadd.f32 0.0, %v2278
        %v2280 = vpop.f32.mrf.mxu0
        %v2281 = vadd.f32 0.0, %v2280
        %2282 = vmatmul.bf16.gmra.mxu0 %v2202
        %v2283 = vpop.f32.mrf.mxu0
        %v2284 = vadd.f32 0.0, %v2283
        %v2285 = vpop.f32.mrf.mxu0
        %v2286 = vadd.f32 0.0, %v2285
        %2287 = vmatmul.bf16.gmra.mxu0 %v2205
        %v2288 = vpop.f32.mrf.mxu0
        %v2289 = vadd.f32 0.0, %v2288
        %v2290 = vpop.f32.mrf.mxu0
        %v2291 = vadd.f32 0.0, %v2290
        %2292 = vmatmul.bf16.gmra.mxu0 %v2208
        %v2293 = vpop.f32.mrf.mxu0
        %v2294 = vadd.f32 0.0, %v2293
        %v2295 = vpop.f32.mrf.mxu0
        %v2296 = vadd.f32 0.0, %v2295
        %2297 = vmatmul.bf16.gmra.mxu0 %v2211
        %v2298 = vpop.f32.mrf.mxu0
        %v2299 = vadd.f32 0.0, %v2298
        %v2300 = vpop.f32.mrf.mxu0
        %v2301 = vadd.f32 0.0, %v2300
        %2302 = vmatmul.bf16.gmra.mxu0 %v2214
        %v2303 = vpop.f32.mrf.mxu0
        %v2304 = vadd.f32 0.0, %v2303
        %v2305 = vpop.f32.mrf.mxu0
        %v2306 = vadd.f32 0.0, %v2305
        %2307 = vmatmul.bf16.gmra.mxu0 %v2217
        %v2308 = vpop.f32.mrf.mxu0
        %v2309 = vadd.f32 0.0, %v2308
        %v2310 = vpop.f32.mrf.mxu0
        %v2311 = vadd.f32 0.0, %v2310
        %2312 = vmatmul.bf16.gmra.mxu0 %v2220
        %v2313 = vpop.f32.mrf.mxu0
        %v2314 = vadd.f32 0.0, %v2313
        %v2315 = vpop.f32.mrf.mxu0
        %v2316 = vadd.f32 0.0, %v2315
        %2317 = vmatmul.bf16.gmra.mxu0 %v2223
        %v2318 = vpop.f32.mrf.mxu0
        %v2319 = vadd.f32 0.0, %v2318
        %v2320 = vpop.f32.mrf.mxu0
        %v2321 = vadd.f32 0.0, %v2320
        %2322 = vmatmul.bf16.gmra.mxu0 %v2226
        %v2323 = vpop.f32.mrf.mxu0
        %v2324 = vadd.f32 0.0, %v2323
        %v2325 = vpop.f32.mrf.mxu0
        %v2326 = vadd.f32 0.0, %v2325
        %2327 = vmatmul.bf16.gmra.mxu0 %v2229
        %v2328 = vpop.f32.mrf.mxu0
        %v2329 = vadd.f32 0.0, %v2328
        %v2330 = vpop.f32.mrf.mxu0
        %v2331 = vadd.f32 0.0, %v2330
        %2332 = vdwg.mxu0
        %v2333 = vadd.f32 %v2101, %v2244
        %v2334 = vadd.f32 %v2102, %v2246
        %v2335 = vadd.f32 %v2103, %v2249
        %v2336 = vadd.f32 %v2104, %v2251
        %v2337 = vadd.f32 %v2105, %v2254
        %v2338 = vadd.f32 %v2106, %v2256
        %v2339 = vadd.f32 %v2107, %v2259
        %v2340 = vadd.f32 %v2108, %v2261
        %v2341 = vadd.f32 %v2109, %v2264
        %v2342 = vadd.f32 %v2110, %v2266
        %v2343 = vadd.f32 %v2111, %v2269
        %v2344 = vadd.f32 %v2112, %v2271
        %v2345 = vadd.f32 %v2113, %v2274
        %v2346 = vadd.f32 %v2114, %v2276
        %v2347 = vadd.f32 %v2115, %v2279
        %v2348 = vadd.f32 %v2116, %v2281
        %v2349 = vadd.f32 %v2117, %v2284
        %v2350 = vadd.f32 %v2118, %v2286
        %v2351 = vadd.f32 %v2119, %v2289
        %v2352 = vadd.f32 %v2120, %v2291
        %v2353 = vadd.f32 %v2121, %v2294
        %v2354 = vadd.f32 %v2122, %v2296
        %v2355 = vadd.f32 %v2123, %v2299
        %v2356 = vadd.f32 %v2124, %v2301
        %v2357 = vadd.f32 %v2125, %v2304
        %v2358 = vadd.f32 %v2126, %v2306
        %v2359 = vadd.f32 %v2127, %v2309
        %v2360 = vadd.f32 %v2128, %v2311
        %v2361 = vadd.f32 %v2129, %v2314
        %v2362 = vadd.f32 %v2130, %v2316
        %v2363 = vadd.f32 %v2131, %v2319
        %v2364 = vadd.f32 %v2132, %v2321
        %v2365 = vadd.f32 %v2133, %v2324
        %v2366 = vadd.f32 %v2134, %v2326
        %v2367 = vadd.f32 %v2135, %v2329
        %v2368 = vadd.f32 %v2136, %v2331
        %v2369 = vld [vmem:[%s3] sm:$0x1]
        %v2371 = vperm.slane %v2369, 0
        %v2373 = vadd.f32 %v2333, %v2371
        %v2374 = vadd.f32 %v2334, %v2371
        %v2375 = vadd.f32 %v2335, %v2371
        %v2376 = vadd.f32 %v2336, %v2371
        %v2377 = vadd.f32 %v2337, %v2371
        %v2378 = vadd.f32 %v2338, %v2371
        %v2379 = vadd.f32 %v2339, %v2371
        %v2380 = vadd.f32 %v2340, %v2371
        %v2381 = vadd.f32 %v2341, %v2371
        %v2382 = vadd.f32 %v2342, %v2371
        %v2383 = vadd.f32 %v2343, %v2371
        %v2384 = vadd.f32 %v2344, %v2371
        %v2385 = vadd.f32 %v2345, %v2371
        %v2386 = vadd.f32 %v2346, %v2371
        %v2387 = vadd.f32 %v2347, %v2371
        %v2388 = vadd.f32 %v2348, %v2371
        %v2389 = vadd.f32 %v2349, %v2371
        %v2390 = vadd.f32 %v2350, %v2371
        %v2391 = vadd.f32 %v2351, %v2371
        %v2392 = vadd.f32 %v2352, %v2371
        %v2393 = vadd.f32 %v2353, %v2371
        %v2394 = vadd.f32 %v2354, %v2371
        %v2395 = vadd.f32 %v2355, %v2371
        %v2396 = vadd.f32 %v2356, %v2371
        %v2397 = vadd.f32 %v2357, %v2371
        %v2398 = vadd.f32 %v2358, %v2371
        %v2399 = vadd.f32 %v2359, %v2371
        %v2400 = vadd.f32 %v2360, %v2371
        %v2401 = vadd.f32 %v2361, %v2371
        %v2402 = vadd.f32 %v2362, %v2371
        %v2403 = vadd.f32 %v2363, %v2371
        %v2404 = vadd.f32 %v2364, %v2371
        %v2405 = vadd.f32 %v2365, %v2371
        %v2406 = vadd.f32 %v2366, %v2371
        %v2407 = vadd.f32 %v2367, %v2371
        %v2408 = vadd.f32 %v2368, %v2371
        %vm2409 = vcmp.gt.f32.partialorder %v2373, 0.0
        %vm2410 = vcmp.gt.f32.partialorder %v2374, 0.0
        %vm2411 = vcmp.gt.f32.partialorder %v2375, 0.0
        %vm2412 = vcmp.gt.f32.partialorder %v2376, 0.0
        %vm2413 = vcmp.gt.f32.partialorder %v2377, 0.0
        %vm2414 = vcmp.gt.f32.partialorder %v2378, 0.0
        %vm2415 = vcmp.gt.f32.partialorder %v2379, 0.0
        %vm2416 = vcmp.gt.f32.partialorder %v2380, 0.0
        %vm2417 = vcmp.gt.f32.partialorder %v2381, 0.0
        %vm2418 = vcmp.gt.f32.partialorder %v2382, 0.0
        %vm2419 = vcmp.gt.f32.partialorder %v2383, 0.0
        %vm2420 = vcmp.gt.f32.partialorder %v2384, 0.0
        %vm2421 = vcmp.gt.f32.partialorder %v2385, 0.0
        %vm2422 = vcmp.gt.f32.partialorder %v2386, 0.0
        %vm2423 = vcmp.gt.f32.partialorder %v2387, 0.0
        %vm2424 = vcmp.gt.f32.partialorder %v2388, 0.0
        %vm2425 = vcmp.gt.f32.partialorder %v2389, 0.0
        %vm2426 = vcmp.gt.f32.partialorder %v2390, 0.0
        %vm2427 = vcmp.gt.f32.partialorder %v2391, 0.0
        %vm2428 = vcmp.gt.f32.partialorder %v2392, 0.0
        %vm2429 = vcmp.gt.f32.partialorder %v2393, 0.0
        %vm2430 = vcmp.gt.f32.partialorder %v2394, 0.0
        %vm2431 = vcmp.gt.f32.partialorder %v2395, 0.0
        %vm2432 = vcmp.gt.f32.partialorder %v2396, 0.0
        %vm2433 = vcmp.gt.f32.partialorder %v2397, 0.0
        %vm2434 = vcmp.gt.f32.partialorder %v2398, 0.0
        %vm2435 = vcmp.gt.f32.partialorder %v2399, 0.0
        %vm2436 = vcmp.gt.f32.partialorder %v2400, 0.0
        %vm2437 = vcmp.gt.f32.partialorder %v2401, 0.0
        %vm2438 = vcmp.gt.f32.partialorder %v2402, 0.0
        %vm2439 = vcmp.gt.f32.partialorder %v2403, 0.0
        %vm2440 = vcmp.gt.f32.partialorder %v2404, 0.0
        %vm2441 = vcmp.gt.f32.partialorder %v2405, 0.0
        %vm2442 = vcmp.gt.f32.partialorder %v2406, 0.0
        %vm2443 = vcmp.gt.f32.partialorder %v2407, 0.0
        %vm2444 = vcmp.gt.f32.partialorder %v2408, 0.0
        %v2445 = vmul.f32 %v2373, 0.2
        %v2446 = vmul.f32 %v2374, 0.2
        %v2447 = vmul.f32 %v2375, 0.2
        %v2448 = vmul.f32 %v2376, 0.2
        %v2449 = vmul.f32 %v2377, 0.2
        %v2450 = vmul.f32 %v2378, 0.2
        %v2451 = vmul.f32 %v2379, 0.2
        %v2452 = vmul.f32 %v2380, 0.2
        %v2453 = vmul.f32 %v2381, 0.2
        %v2454 = vmul.f32 %v2382, 0.2
        %v2455 = vmul.f32 %v2383, 0.2
        %v2456 = vmul.f32 %v2384, 0.2
        %v2457 = vmul.f32 %v2385, 0.2
        %v2458 = vmul.f32 %v2386, 0.2
        %v2459 = vmul.f32 %v2387, 0.2
        %v2460 = vmul.f32 %v2388, 0.2
        %v2461 = vmul.f32 %v2389, 0.2
        %v2462 = vmul.f32 %v2390, 0.2
        %v2463 = vmul.f32 %v2391, 0.2
        %v2464 = vmul.f32 %v2392, 0.2
        %v2465 = vmul.f32 %v2393, 0.2
        %v2466 = vmul.f32 %v2394, 0.2
        %v2467 = vmul.f32 %v2395, 0.2
        %v2468 = vmul.f32 %v2396, 0.2
        %v2469 = vmul.f32 %v2397, 0.2
        %v2470 = vmul.f32 %v2398, 0.2
        %v2471 = vmul.f32 %v2399, 0.2
        %v2472 = vmul.f32 %v2400, 0.2
        %v2473 = vmul.f32 %v2401, 0.2
        %v2474 = vmul.f32 %v2402, 0.2
        %v2475 = vmul.f32 %v2403, 0.2
        %v2476 = vmul.f32 %v2404, 0.2
        %v2477 = vmul.f32 %v2405, 0.2
        %v2478 = vmul.f32 %v2406, 0.2
        %v2479 = vmul.f32 %v2407, 0.2
        %v2480 = vmul.f32 %v2408, 0.2
        %v2481 = vsel %vm2409, %v2373, %v2445
        %v2482 = vsel %vm2410, %v2374, %v2446
        %v2483 = vsel %vm2411, %v2375, %v2447
        %v2484 = vsel %vm2412, %v2376, %v2448
        %v2485 = vsel %vm2413, %v2377, %v2449
        %v2486 = vsel %vm2414, %v2378, %v2450
        %v2487 = vsel %vm2415, %v2379, %v2451
        %v2488 = vsel %vm2416, %v2380, %v2452
        %v2489 = vsel %vm2417, %v2381, %v2453
        %v2490 = vsel %vm2418, %v2382, %v2454
        %v2491 = vsel %vm2419, %v2383, %v2455
        %v2492 = vsel %vm2420, %v2384, %v2456
        %v2493 = vsel %vm2421, %v2385, %v2457
        %v2494 = vsel %vm2422, %v2386, %v2458
        %v2495 = vsel %vm2423, %v2387, %v2459
        %v2496 = vsel %vm2424, %v2388, %v2460
        %v2497 = vsel %vm2425, %v2389, %v2461
        %v2498 = vsel %vm2426, %v2390, %v2462
        %v2499 = vsel %vm2427, %v2391, %v2463
        %v2500 = vsel %vm2428, %v2392, %v2464
        %v2501 = vsel %vm2429, %v2393, %v2465
        %v2502 = vsel %vm2430, %v2394, %v2466
        %v2503 = vsel %vm2431, %v2395, %v2467
        %v2504 = vsel %vm2432, %v2396, %v2468
        %v2505 = vsel %vm2433, %v2397, %v2469
        %v2506 = vsel %vm2434, %v2398, %v2470
        %v2507 = vsel %vm2435, %v2399, %v2471
        %v2508 = vsel %vm2436, %v2400, %v2472
        %v2509 = vsel %vm2437, %v2401, %v2473
        %v2510 = vsel %vm2438, %v2402, %v2474
        %v2511 = vsel %vm2439, %v2403, %v2475
        %v2512 = vsel %vm2440, %v2404, %v2476
        %v2513 = vsel %vm2441, %v2405, %v2477
        %v2514 = vsel %vm2442, %v2406, %v2478
        %v2515 = vsel %vm2443, %v2407, %v2479
        %v2516 = vsel %vm2444, %v2408, %v2480
        %v2517 = vld [vmem:[%s4] sm:$0x1]
        %v2519 = vperm.slane %v2517, 0
        %v2521 = vmul.f32 %v2481, %v2519
        %v2522 = vmul.f32 %v2482, %v2519
        %v2523 = vmul.f32 %v2483, %v2519
        %v2524 = vmul.f32 %v2484, %v2519
        %v2525 = vmul.f32 %v2485, %v2519
        %v2526 = vmul.f32 %v2486, %v2519
        %v2527 = vmul.f32 %v2487, %v2519
        %v2528 = vmul.f32 %v2488, %v2519
        %v2529 = vmul.f32 %v2489, %v2519
        %v2530 = vmul.f32 %v2490, %v2519
        %v2531 = vmul.f32 %v2491, %v2519
        %v2532 = vmul.f32 %v2492, %v2519
        %v2533 = vmul.f32 %v2493, %v2519
        %v2534 = vmul.f32 %v2494, %v2519
        %v2535 = vmul.f32 %v2495, %v2519
        %v2536 = vmul.f32 %v2496, %v2519
        %v2537 = vmul.f32 %v2497, %v2519
        %v2538 = vmul.f32 %v2498, %v2519
        %v2539 = vmul.f32 %v2499, %v2519
        %v2540 = vmul.f32 %v2500, %v2519
        %v2541 = vmul.f32 %v2501, %v2519
        %v2542 = vmul.f32 %v2502, %v2519
        %v2543 = vmul.f32 %v2503, %v2519
        %v2544 = vmul.f32 %v2504, %v2519
        %v2545 = vmul.f32 %v2505, %v2519
        %v2546 = vmul.f32 %v2506, %v2519
        %v2547 = vmul.f32 %v2507, %v2519
        %v2548 = vmul.f32 %v2508, %v2519
        %v2549 = vmul.f32 %v2509, %v2519
        %v2550 = vmul.f32 %v2510, %v2519
        %v2551 = vmul.f32 %v2511, %v2519
        %v2552 = vmul.f32 %v2512, %v2519
        %v2553 = vmul.f32 %v2513, %v2519
        %v2554 = vmul.f32 %v2514, %v2519
        %v2555 = vmul.f32 %v2515, %v2519
        %v2556 = vmul.f32 %v2516, %v2519
        %vm2557 = vcmask 261120
        %v2558 = vsel %vm2557, %v2521, 0.0
        %2559 = vadd.xlane.f32.xlu0 %v2558
        %v2560 = vpop.xlane.xlu0 %2559
        %v2561 = vsel %vm2557, %v2522, 0.0
        %2562 = vadd.xlane.f32.xlu0 %v2561
        %v2563 = vpop.xlane.xlu0 %2562
        %v2564 = vsel %vm2557, %v2523, 0.0
        %2565 = vadd.xlane.f32.xlu0 %v2564
        %v2566 = vpop.xlane.xlu0 %2565
        %v2567 = vsel %vm2557, %v2524, 0.0
        %2568 = vadd.xlane.f32.xlu0 %v2567
        %v2569 = vpop.xlane.xlu0 %2568
        %v2570 = vsel %vm2557, %v2525, 0.0
        %2571 = vadd.xlane.f32.xlu0 %v2570
        %v2572 = vpop.xlane.xlu0 %2571
        %v2573 = vsel %vm2557, %v2526, 0.0
        %2574 = vadd.xlane.f32.xlu0 %v2573
        %v2575 = vpop.xlane.xlu0 %2574
        %v2576 = vsel %vm2557, %v2527, 0.0
        %2577 = vadd.xlane.f32.xlu0 %v2576
        %v2578 = vpop.xlane.xlu0 %2577
        %v2579 = vsel %vm2557, %v2528, 0.0
        %2580 = vadd.xlane.f32.xlu0 %v2579
        %v2581 = vpop.xlane.xlu0 %2580
        %v2582 = vsel %vm2557, %v2529, 0.0
        %2583 = vadd.xlane.f32.xlu0 %v2582
        %v2584 = vpop.xlane.xlu0 %2583
        %v2585 = vsel %vm2557, %v2530, 0.0
        %2586 = vadd.xlane.f32.xlu0 %v2585
        %v2587 = vpop.xlane.xlu0 %2586
        %v2588 = vsel %vm2557, %v2531, 0.0
        %2589 = vadd.xlane.f32.xlu0 %v2588
        %v2590 = vpop.xlane.xlu0 %2589
        %v2591 = vsel %vm2557, %v2532, 0.0
        %2592 = vadd.xlane.f32.xlu0 %v2591
        %v2593 = vpop.xlane.xlu0 %2592
        %v2594 = vsel %vm2557, %v2533, 0.0
        %2595 = vadd.xlane.f32.xlu0 %v2594
        %v2596 = vpop.xlane.xlu0 %2595
        %v2597 = vsel %vm2557, %v2534, 0.0
        %2598 = vadd.xlane.f32.xlu0 %v2597
        %v2599 = vpop.xlane.xlu0 %2598
        %v2600 = vsel %vm2557, %v2535, 0.0
        %2601 = vadd.xlane.f32.xlu0 %v2600
        %v2602 = vpop.xlane.xlu0 %2601
        %v2603 = vsel %vm2557, %v2536, 0.0
        %2604 = vadd.xlane.f32.xlu0 %v2603
        %v2605 = vpop.xlane.xlu0 %2604
        %v2606 = vsel %vm2557, %v2537, 0.0
        %2607 = vadd.xlane.f32.xlu0 %v2606
        %v2608 = vpop.xlane.xlu0 %2607
        %v2609 = vsel %vm2557, %v2538, 0.0
        %2610 = vadd.xlane.f32.xlu0 %v2609
        %v2611 = vpop.xlane.xlu0 %2610
        %v2612 = vsel %vm2557, %v2539, 0.0
        %2613 = vadd.xlane.f32.xlu0 %v2612
        %v2614 = vpop.xlane.xlu0 %2613
        %v2615 = vsel %vm2557, %v2540, 0.0
        %2616 = vadd.xlane.f32.xlu0 %v2615
        %v2617 = vpop.xlane.xlu0 %2616
        %v2618 = vsel %vm2557, %v2541, 0.0
        %2619 = vadd.xlane.f32.xlu0 %v2618
        %v2620 = vpop.xlane.xlu0 %2619
        %v2621 = vsel %vm2557, %v2542, 0.0
        %2622 = vadd.xlane.f32.xlu0 %v2621
        %v2623 = vpop.xlane.xlu0 %2622
        %v2624 = vsel %vm2557, %v2543, 0.0
        %2625 = vadd.xlane.f32.xlu0 %v2624
        %v2626 = vpop.xlane.xlu0 %2625
        %v2627 = vsel %vm2557, %v2544, 0.0
        %2628 = vadd.xlane.f32.xlu0 %v2627
        %v2629 = vpop.xlane.xlu0 %2628
        %v2630 = vsel %vm2557, %v2545, 0.0
        %2631 = vadd.xlane.f32.xlu0 %v2630
        %v2632 = vpop.xlane.xlu0 %2631
        %v2633 = vsel %vm2557, %v2546, 0.0
        %2634 = vadd.xlane.f32.xlu0 %v2633
        %v2635 = vpop.xlane.xlu0 %2634
        %v2636 = vsel %vm2557, %v2547, 0.0
        %2637 = vadd.xlane.f32.xlu0 %v2636
        %v2638 = vpop.xlane.xlu0 %2637
        %v2639 = vsel %vm2557, %v2548, 0.0
        %2640 = vadd.xlane.f32.xlu0 %v2639
        %v2641 = vpop.xlane.xlu0 %2640
        %v2642 = vsel %vm2557, %v2549, 0.0
        %2643 = vadd.xlane.f32.xlu0 %v2642
        %v2644 = vpop.xlane.xlu0 %2643
        %v2645 = vsel %vm2557, %v2550, 0.0
        %2646 = vadd.xlane.f32.xlu0 %v2645
        %v2647 = vpop.xlane.xlu0 %2646
        %v2648 = vsel %vm2557, %v2551, 0.0
        %2649 = vadd.xlane.f32.xlu0 %v2648
        %v2650 = vpop.xlane.xlu0 %2649
        %v2651 = vsel %vm2557, %v2552, 0.0
        %2652 = vadd.xlane.f32.xlu0 %v2651
        %v2653 = vpop.xlane.xlu0 %2652
        %v2654 = vsel %vm2557, %v2553, 0.0
        %2655 = vadd.xlane.f32.xlu0 %v2654
        %v2656 = vpop.xlane.xlu0 %2655
        %v2657 = vsel %vm2557, %v2554, 0.0
        %2658 = vadd.xlane.f32.xlu0 %v2657
        %v2659 = vpop.xlane.xlu0 %2658
        %v2660 = vsel %vm2557, %v2555, 0.0
        %2661 = vadd.xlane.f32.xlu0 %v2660
        %v2662 = vpop.xlane.xlu0 %2661
        %vm2663 = vcmask 259072
        %v2664 = vsel %vm2663, %v2556, 0.0
        %2665 = vadd.xlane.f32.xlu0 %v2664
        %v2666 = vpop.xlane.xlu0 %2665
        %v2667 = vld [vmem:[#allocation2] sm:$0x1]
        %v2669 = vperm.slane %v2667, 0
        %v2671 = vadd.f32 %v2560, %v2669
        %v2672 = vadd.f32 %v2563, %v2669
        %v2673 = vadd.f32 %v2566, %v2669
        %v2674 = vadd.f32 %v2569, %v2669
        %v2675 = vadd.f32 %v2572, %v2669
        %v2676 = vadd.f32 %v2575, %v2669
        %v2677 = vadd.f32 %v2578, %v2669
        %v2678 = vadd.f32 %v2581, %v2669
        %v2679 = vadd.f32 %v2584, %v2669
        %v2680 = vadd.f32 %v2587, %v2669
        %v2681 = vadd.f32 %v2590, %v2669
        %v2682 = vadd.f32 %v2593, %v2669
        %v2683 = vadd.f32 %v2596, %v2669
        %v2684 = vadd.f32 %v2599, %v2669
        %v2685 = vadd.f32 %v2602, %v2669
        %v2686 = vadd.f32 %v2605, %v2669
        %v2687 = vadd.f32 %v2608, %v2669
        %v2688 = vadd.f32 %v2611, %v2669
        %v2689 = vadd.f32 %v2614, %v2669
        %v2690 = vadd.f32 %v2617, %v2669
        %v2691 = vadd.f32 %v2620, %v2669
        %v2692 = vadd.f32 %v2623, %v2669
        %v2693 = vadd.f32 %v2626, %v2669
        %v2694 = vadd.f32 %v2629, %v2669
        %v2695 = vadd.f32 %v2632, %v2669
        %v2696 = vadd.f32 %v2635, %v2669
        %v2697 = vadd.f32 %v2638, %v2669
        %v2698 = vadd.f32 %v2641, %v2669
        %v2699 = vadd.f32 %v2644, %v2669
        %v2700 = vadd.f32 %v2647, %v2669
        %v2701 = vadd.f32 %v2650, %v2669
        %v2702 = vadd.f32 %v2653, %v2669
        %v2703 = vadd.f32 %v2656, %v2669
        %v2704 = vadd.f32 %v2659, %v2669
        %v2705 = vadd.f32 %v2662, %v2669
        %v2706 = vadd.f32 %v2666, %v2669
        %p2707 = scmp.lt.s32.totalorder %s22, 2
        %s2708 = scalar_select %p2707, 1, 0
        %s2709 = scvt.s32.f32 %s2708
        %v2710 = vld [vmem:[%s1] sm:$0xff]
        %v2711 = vld [vmem:[%s1 + $0x8] sm:$0xff]
        %v2712 = vld [vmem:[%s1 + $0x10] sm:$0xff]
        %v2713 = vld [vmem:[%s1 + $0x18] sm:$0xff]
        %v2714 = vld [vmem:[%s1 + $0x20] sm:$0xff]
        %v2715 = vld [vmem:[%s1 + $0x28] sm:$0xff]
        %v2716 = vld [vmem:[%s1 + $0x30] sm:$0xff]
        %v2717 = vld [vmem:[%s1 + $0x38] sm:$0xff]
        %v2718 = vld [vmem:[%s1 + $0x40] sm:$0xff]
        %v2719 = vld [vmem:[%s1 + $0x48] sm:$0xff]
        %v2720 = vld [vmem:[%s1 + $0x50] sm:$0xff]
        %v2721 = vld [vmem:[%s1 + $0x58] sm:$0xff]
        %v2722 = vld [vmem:[%s1 + $0x60] sm:$0xff]
        %v2723 = vld [vmem:[%s1 + $0x68] sm:$0xff]
        %v2724 = vld [vmem:[%s1 + $0x70] sm:$0xff]
        %v2725 = vld [vmem:[%s1 + $0x78] sm:$0xff]
        %v2726 = vld [vmem:[%s1 + $0x80] sm:$0xff]
        %v2727 = vld [vmem:[%s1 + $0x88] sm:$0xff]
        %v2728 = vld [vmem:[%s1 + $0x90] sm:$0xff]
        %v2729 = vld [vmem:[%s1 + $0x98] sm:$0xff]
        %v2730 = vld [vmem:[%s1 + $0xa0] sm:$0xff]
        %v2731 = vld [vmem:[%s1 + $0xa8] sm:$0xff]
        %v2732 = vld [vmem:[%s1 + $0xb0] sm:$0xff]
        %v2733 = vld [vmem:[%s1 + $0xb8] sm:$0xff]
        %v2734 = vld [vmem:[%s1 + $0xc0] sm:$0xff]
        %v2735 = vld [vmem:[%s1 + $0xc8] sm:$0xff]
        %v2736 = vld [vmem:[%s1 + $0xd0] sm:$0xff]
        %v2737 = vld [vmem:[%s1 + $0xd8] sm:$0xff]
        %v2738 = vld [vmem:[%s1 + $0xe0] sm:$0xff]
        %v2739 = vld [vmem:[%s1 + $0xe8] sm:$0xff]
        %v2740 = vld [vmem:[%s1 + $0xf0] sm:$0xff]
        %v2741 = vld [vmem:[%s1 + $0xf8] sm:$0xff]
        %v2742 = vld [vmem:[%s1 + $0x100] sm:$0xff]
        %v2743 = vld [vmem:[%s1 + $0x108] sm:$0xff]
        %v2744 = vld [vmem:[%s1 + $0x110] sm:$0xff]
        %v2745 = vld [vmem:[%s1 + $0x118] sm:$0x3f]
        %v2746 = vstv %s2709
        %v2747 = vsub.f32 %v2746, %v2671
        %v2748 = vsub.f32 %v2746, %v2672
        %v2749 = vsub.f32 %v2746, %v2673
        %v2750 = vsub.f32 %v2746, %v2674
        %v2751 = vsub.f32 %v2746, %v2675
        %v2752 = vsub.f32 %v2746, %v2676
        %v2753 = vsub.f32 %v2746, %v2677
        %v2754 = vsub.f32 %v2746, %v2678
        %v2755 = vsub.f32 %v2746, %v2679
        %v2756 = vsub.f32 %v2746, %v2680
        %v2757 = vsub.f32 %v2746, %v2681
        %v2758 = vsub.f32 %v2746, %v2682
        %v2759 = vsub.f32 %v2746, %v2683
        %v2760 = vsub.f32 %v2746, %v2684
        %v2761 = vsub.f32 %v2746, %v2685
        %v2762 = vsub.f32 %v2746, %v2686
        %v2763 = vsub.f32 %v2746, %v2687
        %v2764 = vsub.f32 %v2746, %v2688
        %v2765 = vsub.f32 %v2746, %v2689
        %v2766 = vsub.f32 %v2746, %v2690
        %v2767 = vsub.f32 %v2746, %v2691
        %v2768 = vsub.f32 %v2746, %v2692
        %v2769 = vsub.f32 %v2746, %v2693
        %v2770 = vsub.f32 %v2746, %v2694
        %v2771 = vsub.f32 %v2746, %v2695
        %v2772 = vsub.f32 %v2746, %v2696
        %v2773 = vsub.f32 %v2746, %v2697
        %v2774 = vsub.f32 %v2746, %v2698
        %v2775 = vsub.f32 %v2746, %v2699
        %v2776 = vsub.f32 %v2746, %v2700
        %v2777 = vsub.f32 %v2746, %v2701
        %v2778 = vsub.f32 %v2746, %v2702
        %v2779 = vsub.f32 %v2746, %v2703
        %v2780 = vsub.f32 %v2746, %v2704
        %v2781 = vsub.f32 %v2746, %v2705
        %v2782 = vsub.f32 %v2746, %v2706
        %v2783 = vmul.f32 %v2747, %v2747
        %v2784 = vmul.f32 %v2748, %v2748
        %v2785 = vmul.f32 %v2749, %v2749
        %v2786 = vmul.f32 %v2750, %v2750
        %v2787 = vmul.f32 %v2751, %v2751
        %v2788 = vmul.f32 %v2752, %v2752
        %v2789 = vmul.f32 %v2753, %v2753
        %v2790 = vmul.f32 %v2754, %v2754
        %v2791 = vmul.f32 %v2755, %v2755
        %v2792 = vmul.f32 %v2756, %v2756
        %v2793 = vmul.f32 %v2757, %v2757
        %v2794 = vmul.f32 %v2758, %v2758
        %v2795 = vmul.f32 %v2759, %v2759
        %v2796 = vmul.f32 %v2760, %v2760
        %v2797 = vmul.f32 %v2761, %v2761
        %v2798 = vmul.f32 %v2762, %v2762
        %v2799 = vmul.f32 %v2763, %v2763
        %v2800 = vmul.f32 %v2764, %v2764
        %v2801 = vmul.f32 %v2765, %v2765
        %v2802 = vmul.f32 %v2766, %v2766
        %v2803 = vmul.f32 %v2767, %v2767
        %v2804 = vmul.f32 %v2768, %v2768
        %v2805 = vmul.f32 %v2769, %v2769
        %v2806 = vmul.f32 %v2770, %v2770
        %v2807 = vmul.f32 %v2771, %v2771
        %v2808 = vmul.f32 %v2772, %v2772
        %v2809 = vmul.f32 %v2773, %v2773
        %v2810 = vmul.f32 %v2774, %v2774
        %v2811 = vmul.f32 %v2775, %v2775
        %v2812 = vmul.f32 %v2776, %v2776
        %v2813 = vmul.f32 %v2777, %v2777
        %v2814 = vmul.f32 %v2778, %v2778
        %v2815 = vmul.f32 %v2779, %v2779
        %v2816 = vmul.f32 %v2780, %v2780
        %v2817 = vmul.f32 %v2781, %v2781
        %v2818 = vmul.f32 %v2782, %v2782
        %v2819 = vmul.f32 %v2710, %v2783
        %v2820 = vmul.f32 %v2711, %v2784
        %v2821 = vmul.f32 %v2712, %v2785
        %v2822 = vmul.f32 %v2713, %v2786
        %v2823 = vmul.f32 %v2714, %v2787
        %v2824 = vmul.f32 %v2715, %v2788
        %v2825 = vmul.f32 %v2716, %v2789
        %v2826 = vmul.f32 %v2717, %v2790
        %v2827 = vmul.f32 %v2718, %v2791
        %v2828 = vmul.f32 %v2719, %v2792
        %v2829 = vmul.f32 %v2720, %v2793
        %v2830 = vmul.f32 %v2721, %v2794
        %v2831 = vmul.f32 %v2722, %v2795
        %v2832 = vmul.f32 %v2723, %v2796
        %v2833 = vmul.f32 %v2724, %v2797
        %v2834 = vmul.f32 %v2725, %v2798
        %v2835 = vmul.f32 %v2726, %v2799
        %v2836 = vmul.f32 %v2727, %v2800
        %v2837 = vmul.f32 %v2728, %v2801
        %v2838 = vmul.f32 %v2729, %v2802
        %v2839 = vmul.f32 %v2730, %v2803
        %v2840 = vmul.f32 %v2731, %v2804
        %v2841 = vmul.f32 %v2732, %v2805
        %v2842 = vmul.f32 %v2733, %v2806
        %v2843 = vmul.f32 %v2734, %v2807
        %v2844 = vmul.f32 %v2735, %v2808
        %v2845 = vmul.f32 %v2736, %v2809
        %v2846 = vmul.f32 %v2737, %v2810
        %v2847 = vmul.f32 %v2738, %v2811
        %v2848 = vmul.f32 %v2739, %v2812
        %v2849 = vmul.f32 %v2740, %v2813
        %v2850 = vmul.f32 %v2741, %v2814
        %v2851 = vmul.f32 %v2742, %v2815
        %v2852 = vmul.f32 %v2743, %v2816
        %v2853 = vmul.f32 %v2744, %v2817
        %v2854 = vmul.f32 %v2745, %v2818
        %vm2855 = vcmask 7168
        %v2856 = vsel %vm2855, %v2819, 0.0
        %v2857 = vsel %vm2855, %v2820, 0.0
        %v2858 = vadd.f32 %v2856, %v2857
        %v2859 = vsel %vm2855, %v2821, 0.0
        %v2860 = vadd.f32 %v2858, %v2859
        %v2861 = vsel %vm2855, %v2822, 0.0
        %v2862 = vadd.f32 %v2860, %v2861
        %v2863 = vsel %vm2855, %v2823, 0.0
        %v2864 = vadd.f32 %v2862, %v2863
        %v2865 = vsel %vm2855, %v2824, 0.0
        %v2866 = vadd.f32 %v2864, %v2865
        %v2867 = vsel %vm2855, %v2825, 0.0
        %v2868 = vadd.f32 %v2866, %v2867
        %v2869 = vsel %vm2855, %v2826, 0.0
        %v2870 = vadd.f32 %v2868, %v2869
        %v2871 = vsel %vm2855, %v2827, 0.0
        %v2872 = vadd.f32 %v2870, %v2871
        %v2873 = vsel %vm2855, %v2828, 0.0
        %v2874 = vadd.f32 %v2872, %v2873
        %v2875 = vsel %vm2855, %v2829, 0.0
        %v2876 = vadd.f32 %v2874, %v2875
        %v2877 = vsel %vm2855, %v2830, 0.0
        %v2878 = vadd.f32 %v2876, %v2877
        %v2879 = vsel %vm2855, %v2831, 0.0
        %v2880 = vadd.f32 %v2878, %v2879
        %v2881 = vsel %vm2855, %v2832, 0.0
        %v2882 = vadd.f32 %v2880, %v2881
        %v2883 = vsel %vm2855, %v2833, 0.0
        %v2884 = vadd.f32 %v2882, %v2883
        %v2885 = vsel %vm2855, %v2834, 0.0
        %v2886 = vadd.f32 %v2884, %v2885
        %v2887 = vsel %vm2855, %v2835, 0.0
        %v2888 = vadd.f32 %v2886, %v2887
        %v2889 = vsel %vm2855, %v2836, 0.0
        %v2890 = vadd.f32 %v2888, %v2889
        %v2891 = vsel %vm2855, %v2837, 0.0
        %v2892 = vadd.f32 %v2890, %v2891
        %v2893 = vsel %vm2855, %v2838, 0.0
        %v2894 = vadd.f32 %v2892, %v2893
        %v2895 = vsel %vm2855, %v2839, 0.0
        %v2896 = vadd.f32 %v2894, %v2895
        %v2897 = vsel %vm2855, %v2840, 0.0
        %v2898 = vadd.f32 %v2896, %v2897
        %v2899 = vsel %vm2855, %v2841, 0.0
        %v2900 = vadd.f32 %v2898, %v2899
        %v2901 = vsel %vm2855, %v2842, 0.0
        %v2902 = vadd.f32 %v2900, %v2901
        %v2903 = vsel %vm2855, %v2843, 0.0
        %v2904 = vadd.f32 %v2902, %v2903
        %v2905 = vsel %vm2855, %v2844, 0.0
        %v2906 = vadd.f32 %v2904, %v2905
        %v2907 = vsel %vm2855, %v2845, 0.0
        %v2908 = vadd.f32 %v2906, %v2907
        %v2909 = vsel %vm2855, %v2846, 0.0
        %v2910 = vadd.f32 %v2908, %v2909
        %v2911 = vsel %vm2855, %v2847, 0.0
        %v2912 = vadd.f32 %v2910, %v2911
        %v2913 = vsel %vm2855, %v2848, 0.0
        %v2914 = vadd.f32 %v2912, %v2913
        %v2915 = vsel %vm2855, %v2849, 0.0
        %v2916 = vadd.f32 %v2914, %v2915
        %v2917 = vsel %vm2855, %v2850, 0.0
        %v2918 = vadd.f32 %v2916, %v2917
        %v2919 = vsel %vm2855, %v2851, 0.0
        %v2920 = vadd.f32 %v2918, %v2919
        %v2921 = vsel %vm2855, %v2852, 0.0
        %v2922 = vadd.f32 %v2920, %v2921
        %v2923 = vsel %vm2855, %v2853, 0.0
        %v2924 = vadd.f32 %v2922, %v2923
        %vm2925 = vcmask 5120
        %v2926 = vsel %vm2925, %v2854, 0.0
        %v2927 = vadd.f32 %v2924, %v2926
        %2928 = vadd.xlane.f32.xlu0 %v2927
        %v2929 = vpop.xlane.xlu0 %2928
        %v2930 = vrot.slane %v2929, 4
        %v2931 = vadd.f32 %v2929, %v2930
        %v2932 = vrot.slane %v2931, 2
        %v2933 = vadd.f32 %v2931, %v2932
        %v2934 = vrot.slane %v2933, 1
        %v2935 = vadd.f32 %v2933, %v2934
        %s2936 = vtos %v2935
        %v2937 = vlaneseq
        %v2938 = vand.u32 %v2937, 127
        %vm2939 = vcmp.eq.s32.totalorder %v2938, 0
        %v2940 = vstv %s2936
        %v2941 = vsel %vm2939, %v2940, 0.0
        %2942 = vst [vmem:[%s245] sm:$0x1] %v2941
        %s2943 = sand.u32 %s161, 1
        %s2944 = scalar_lea.sflag [#allocation4], %s2943
        %s2945 = sand.u32 %s161, 1
        %s2946 = scalar_lea.vmem [#allocation3], %s2945
        // Predicated region
        $region45: #{tpu_custom_call.1} parent=43 // pred_check
          %p2947 = pneg %p171
        $region46: #{tpu_custom_call.1} parent=43 // pred_check_branch
          %2949 = sbr.rel (%p2947) target = $region48
        $region47: #{tpu_custom_call.1} parent=43 // pred_region
          %2951 = vsyncadd %s2944, 0
          %s2952 = scalar_lea.hbm %s6, %s22
          %s2954 = sshll.u32 %s2946, 4
          %s2955 = int_to_ptr.vmem [resolvable:$true] %s2954
          %s2956 = sshll.u32 %s2952, 4
          %s2957 = int_to_ptr.hbm [resolvable:$true] %s2956
          %2959 = dma.vmem_to_hbm [thread:$0]  %s2955, 16, %s2957, %s2944
        $region48: #{tpu_custom_call.1} parent=43 // pred_fallthru
          _
      $region44: #{tpu_custom_call.1} parent=5 // pred_fallthru
        _
      %p2960 = scmp.le.s32.totalorder 2, %s17
      // Predicated region
      $region49: #{tpu_custom_call.1} parent=5 // pred_check
        %p2961 = pneg %p2960
      $region50: #{tpu_custom_call.1} parent=5 // pred_check_branch
        %2963 = sbr.rel (%p2961) target = $region52
      $region51: #{tpu_custom_call.1} parent=5 // pred_region
        %s2964 = ssub.s32 %s17, 2
        // Predicated region
        $region53: #{tpu_custom_call.1} parent=51 // pred_check
          %p2965 = pneg %p177
        $region54: #{tpu_custom_call.1} parent=51 // pred_check_branch
          %2967 = sbr.rel (%p2965) target = $region56
        $region55: #{tpu_custom_call.1} parent=51 // pred_region
          %s2968 = sand.u32 %s162, 1
          %s2969 = scalar_lea.sflag [#allocation4], %s2968
          %s2970 = sand.u32 %s162, 1
          %s2971 = scalar_lea.vmem [#allocation3], %s2970
          %2973 = dma.done %s2969, 16
        $region56: #{tpu_custom_call.1} parent=51 // pred_fallthru
          _
      $region52: #{tpu_custom_call.1} parent=5 // pred_fallthru
        _
    $region6: #{tpu_custom_call.1} parent=1 // loop_footer
      %s21 = sadd.s32 1, %s17
    $region7: #{tpu_custom_call.1} parent=1 // loop_footer_branch
      %16 = sbr.rel target = $region3
    $region8: #{tpu_custom_call.1} parent=1 // loop_exit
      _
    %2974 = vsyncpa [#allocation4], 1
    %s2975 = scalar_lea.sflag [#allocation4], 1
    %2976 = vsyncpa %s2975, 1

</llo_original>
